<compile_context>
chip_gen: v7x
topology: tpu7x:2x2x1
jax: 0.10.0
libtpu: 0.0.40
codegen_flags: <defaults>
</compile_context>

<pallas_src>
import jax
import jax.numpy as jnp
from jax.experimental import pallas as pl
from jax.experimental.pallas import tpu as pltpu


def _mm_relu_sqrt_kernel(a_ref, w_ref, o_ref):
    """Fused matmul + ReLU + sqrt epilogue (no K loop: full-K blocks)."""
    acc = jnp.dot(a_ref[...], w_ref[...], preferred_element_type=jnp.float32)
    o_ref[...] = jnp.sqrt(jnp.maximum(acc, 0.0)).astype(o_ref.dtype)


def mm_relu_sqrt(inputs, weights, *, tm=128, tn=512):
    M, K = inputs.shape
    K2, N = weights.shape
    assert K == K2, "inner dims must match"
    assert N % tn == 0, "N must be divisible by tn"

    cost = pl.CostEstimate(
        flops=2 * M * K * N,
        transcendentals=M * N,                       # sqrt epilogue
        bytes_accessed=(M * K + K * N + M * N) * 4,
    )
    cparams = dict(vmem_limit_bytes=32 * 1024 * 1024)

    if M <= tm:
        # Single "parallel" axis over N tiles; activations stay resident.
        grid = (N // tn,)
        in_specs = [
            pl.BlockSpec((M, K), lambda j: (0, 0)),     # full activations
            pl.BlockSpec((K, tn), lambda j: (0, j)),    # full-K weight slab
        ]
        out_specs = pl.BlockSpec((M, tn), lambda j: (0, j))
        dims = ("parallel",)
    else:
        assert M % tm == 0, "M must be divisible by tm"
        # j (weights column slab) outer, i (activation rows) inner:
        # the weight block index is constant across the inner loop, so each
        # weight byte is fetched from HBM exactly once per j.
        grid = (N // tn, M // tm)
        in_specs = [
            pl.BlockSpec((tm, K), lambda j, i: (i, 0)),
            pl.BlockSpec((K, tn), lambda j, i: (0, j)),
        ]
        out_specs = pl.BlockSpec((tm, tn), lambda j, i: (j, i) and (i, j))
        # (lambda above must return (i, j) block indices for the (M, N) output)
        out_specs = pl.BlockSpec((tm, tn), lambda j, i: (i, j))
        dims = ("parallel", "parallel")

    return pl.pallas_call(
        _mm_relu_sqrt_kernel,
        out_shape=jax.ShapeDtypeStruct((M, N), inputs.dtype),
        grid=grid,
        in_specs=in_specs,
        out_specs=out_specs,
        compiler_params=pltpu.CompilerParams(
            dimension_semantics=dims, **cparams
        ),
        cost_estimate=cost,
    )(inputs, weights)


if __name__ == "__main__":
    key = jax.random.PRNGKey(0)
    k_in, k_w = jax.random.split(key)

    # Module fixes K = N = 1024 (weights are a 1024x1024 parameter);
    # keep the batch dimension small and MXU-aligned.
    M, K, N = 128, 1024, 1024
    inputs = jax.random.normal(k_in, (M, K), dtype=jnp.float32)
    # Deterministic stand-in for torch.randn(1024, 1024) parameter.
    weights = jax.random.normal(k_w, (K, N), dtype=jnp.float32)

    out = mm_relu_sqrt(inputs, weights)
    out = jax.block_until_ready(out)

    # Sanity check against pure-JAX reference.
    ref = jnp.sqrt(jnp.maximum(inputs @ weights, 0.0))
    assert out.shape == (M, N)
    assert jnp.allclose(out, ref, atol=1e-3, rtol=1e-3)

    print("KERNEL_OK")
</pallas_src>

<mosaic_0001>
module attributes {stable_mosaic.version = 11 : i64} {
  func.func @_mm_relu_sqrt_kernel(%arg0: i32, %arg1: memref<128x1024xf32, #tpu.memory_space<vmem>>, %arg2: memref<1024x512xf32, #tpu.memory_space<vmem>>, %arg3: memref<128x512xf32, #tpu.memory_space<vmem>>) attributes {dimension_semantics = [#tpu.dimension_semantics<parallel>], iteration_bounds = array<i64: 2>, scalar_prefetch = 0 : i64, scratch_operands = 0 : i64, tpu.core_type = #tpu.core_type<tc>, window_params = [{pipeline_mode = #tpu.pipeline_mode<synchronous>, transform_indices = @transform_0, window_bounds = array<i64: 128, 1024>}, {transform_indices = @transform_1, window_bounds = array<i64: 1024, 512>}, {transform_indices = @transform_2, window_bounds = array<i64: 128, 512>}]} {
    %c0 = arith.constant 0 : index
    %c0_0 = arith.constant 0 : index
    %0 = vector.load %arg1[%c0, %c0_0] : memref<128x1024xf32, #tpu.memory_space<vmem>>, vector<128x1024xf32>
    %c0_1 = arith.constant 0 : index
    %c0_2 = arith.constant 0 : index
    %1 = vector.load %arg2[%c0_1, %c0_2] : memref<1024x512xf32, #tpu.memory_space<vmem>>, vector<1024x512xf32>
    %cst = arith.constant dense<0.000000e+00> : vector<128x512xf32>
    %2 = tpu.matmul %0, %1, %cst {dimension_numbers = #tpu.dot_dimension_numbers<[1], [0], [0], [1], [0, 0, 1, 1], [], []>} : vector<128x1024xf32>, vector<1024x512xf32>, vector<128x512xf32> -> vector<128x512xf32>
    %cst_3 = arith.constant 0.000000e+00 : f32
    %3 = vector.broadcast %cst_3 : f32 to vector<128x512xf32>
    %4 = arith.maximumf %2, %3 : vector<128x512xf32>
    %5 = math.sqrt %4 : vector<128x512xf32>
    %c0_4 = arith.constant 0 : index
    %c0_5 = arith.constant 0 : index
    %6 = vector.load %arg3[%c0_4, %c0_5] : memref<128x512xf32, #tpu.memory_space<vmem>>, vector<128x512xf32>
    tpu.vector_store %arg3[%c0_4, %c0_5], %5 {strides = array<i32>} : memref<128x512xf32, #tpu.memory_space<vmem>>, vector<128x512xf32>,
    return
  }
  func.func @transform_0(%arg0: i32) -> (i32, i32) {
    %c0_i32 = arith.constant 0 : i32
    %c0_i32_0 = arith.constant 0 : i32
    %c0_i32_1 = arith.constant 0 : i32
    return %c0_i32, %c0_i32_0 : i32, i32
  }
  func.func @transform_1(%arg0: i32) -> (i32, i32) {
    %c0_i32 = arith.constant 0 : i32
    %c0_i32_0 = arith.constant 0 : i32
    return %c0_i32, %arg0 : i32, i32
  }
  func.func @transform_2(%arg0: i32) -> (i32, i32) {
    %c0_i32 = arith.constant 0 : i32
    %c0_i32_0 = arith.constant 0 : i32
    return %c0_i32, %arg0 : i32, i32
  }
}

</mosaic_0001>

<llo_original>
// kernel: tpu_custom_call.1
$region0: #{tpu_custom_call.1}
  #allocation0 [shape = 'u32[]', space=smem, size = 0x4, offset = 0x4, fixed_abs, tag = 'smem constant byte address 0x4 - core index']
  #allocation1 [shape = 'u32[144,128]{1,0:T(1,128)}', space=vmem, size = 0x12000, scoped, tag = 'internal scratch']
  %s0 = inlined_call_operand.hbm [shape: f32[128,1024], index: 0, kind: input, shape index: {}]
  %s1 = inlined_call_operand.hbm [shape: f32[1024,1024], index: 1, kind: input, shape index: {}]
  %s2 = inlined_call_operand.hbm [shape: f32[128,1024], index: 2, kind: output, shape index: {}]
  %s3 = sld [smem:[#allocation0]]
  $region49: #{tpu_custom_call.1} parent=0
    _
  %s5 = ssub.s32 1, %s3
  %s6 = scalar_select 0, %s5, %s3
  $region1: #{tpu_custom_call.1} parent=0
    #allocation2 [shape = 'u8[524288]{0}', space=vmem, size = 0x80000, scoped, tag = 'input window, operand 0, single buffered']
    #allocation3 [shape = 's32[2]{0}', space=sflag, size = 0x8, scoped, tag = 'scoped memory for tpu_custom_call.1']
    #allocation4 [shape = 's32[2]{0}', space=sflag, size = 0x8, scoped, tag = 'scoped memory for tpu_custom_call.1']
    #allocation5 [shape = 'u8[4194304]{0}', space=vmem, size = 0x400000, scoped, tag = 'input window, operand 1']
    #allocation6 [shape = 's32[2]{0}', space=sflag, size = 0x8, scoped, tag = 'scoped memory for tpu_custom_call.1']
    #allocation7 [shape = 'u8[524288]{0}', space=vmem, size = 0x80000, scoped, tag = 'output window, operand 0']
    %7 = vsyncpa [#allocation3], 0
    %8 = vsyncpa [#allocation6], 0
    %s9 = scalar_lea.sflag [#allocation6], 1
    %10 = vsyncpa %s9, 0
    %11 = vsyncpa [#allocation4], 0
    %s12 = scalar_lea.sflag [#allocation4], 1
    %13 = vsyncpa %s12, 0
    loop: start=0, step=1, limit=4
    $region2: #{tpu_custom_call.1} parent=1 // loop_pre_header
      _
    $region3: #{tpu_custom_call.1} parent=1 // loop_header
      %s15 = sphi 0, %s19
      %p16 = scmp.ge.s32.totalorder %s15, 4
      %s23 = sphi 0, %s23
      %s25 = sphi 0, %s23
      %s26 = sphi 0, %s25
      %s40 = sphi 0, %s26
      %s46 = sphi 0, %s48
      %s49 = sphi 0, %s46
      %s50 = sphi 0, %s49
      %s66 = sphi 0, %s50
      %s72 = sphi 0, %s74
      %s75 = sphi 0, %s72
      %s76 = sphi 0, %s75
      %s92 = sphi 0, %s76
    $region4: #{tpu_custom_call.1} parent=1 // loop_header_branch
      %18 = sbr.rel (%p16) target = $region8
    $region5: #{tpu_custom_call.1} parent=1 // loop_body
      %s20 = ssub.s32 %s15, 1
      %s21 = ssub.s32 %s15, 2
      %s22 = sadd.s32 %s15, 1
      %s24 = sadd.s32 %s23, 1
      %p27 = scmp.eq.s32.totalorder %s15, 1
      %p28 = scmp.ne.s32.totalorder %s23, %s25
      %p29 = scmp.eq.s32.totalorder %s15, 0
      %p30 = por %p28, %p29
      %p31 = scmp.ne.s32.totalorder %s23, %s25
      %p32 = scmp.eq.s32.totalorder %s20, 1
      %p33 = por %p31, %p32
      %p34 = scmp.ne.s32.totalorder %s25, %s26
      %p35 = scmp.eq.s32.totalorder %s20, 0
      %p36 = por %p34, %p35
      %p37 = scmp.ne.s32.totalorder %s25, %s26
      %p38 = scmp.eq.s32.totalorder %s21, 1
      %p39 = por %p37, %p38
      %p41 = scmp.ne.s32.totalorder %s26, %s40
      %p42 = scmp.eq.s32.totalorder %s21, 0
      %p43 = por %p41, %p42
      %s44 = ssub.s32 %s15, %s22
      %p45 = scmp.eq.s32.totalorder %s44, 0
      %s47 = sadd.s32 %s46, 1
      %s48 = scalar_select %p45, %s46, %s47
      %p51 = pneg %p45
      %p52 = scmp.eq.s32.totalorder %s15, 1
      %p53 = por %p51, %p52
      %p54 = scmp.ne.s32.totalorder %s46, %s49
      %p55 = scmp.eq.s32.totalorder %s15, 0
      %p56 = por %p54, %p55
      %p57 = scmp.ne.s32.totalorder %s46, %s49
      %p58 = scmp.eq.s32.totalorder %s20, 1
      %p59 = por %p57, %p58
      %p60 = scmp.ne.s32.totalorder %s49, %s50
      %p61 = scmp.eq.s32.totalorder %s20, 0
      %p62 = por %p60, %p61
      %p63 = scmp.ne.s32.totalorder %s49, %s50
      %p64 = scmp.eq.s32.totalorder %s21, 1
      %p65 = por %p63, %p64
      %p67 = scmp.ne.s32.totalorder %s50, %s66
      %p68 = scmp.eq.s32.totalorder %s21, 0
      %p69 = por %p67, %p68
      %s70 = ssub.s32 %s15, %s22
      %p71 = scmp.eq.s32.totalorder %s70, 0
      %s73 = sadd.s32 %s72, 1
      %s74 = scalar_select %p71, %s72, %s73
      %p77 = pneg %p71
      %p78 = scmp.eq.s32.totalorder %s15, 1
      %p79 = por %p77, %p78
      %p80 = scmp.ne.s32.totalorder %s72, %s75
      %p81 = scmp.eq.s32.totalorder %s15, 0
      %p82 = por %p80, %p81
      %p83 = scmp.ne.s32.totalorder %s72, %s75
      %p84 = scmp.eq.s32.totalorder %s20, 1
      %p85 = por %p83, %p84
      %p86 = scmp.ne.s32.totalorder %s75, %s76
      %p87 = scmp.eq.s32.totalorder %s20, 0
      %p88 = por %p86, %p87
      %p89 = scmp.ne.s32.totalorder %s75, %s76
      %p90 = scmp.eq.s32.totalorder %s21, 1
      %p91 = por %p89, %p90
      %p93 = scmp.ne.s32.totalorder %s76, %s92
      %p94 = scmp.eq.s32.totalorder %s21, 0
      %p95 = por %p93, %p94
      %p96 = scmp.le.s32.totalorder 1, %s15
      %p97 = scmp.lt.s32.totalorder %s15, 3
      %p98 = pnand %p96, %p97
      %p99 = pneg %p98
      // Predicated region
      $region9: #{tpu_custom_call.1} parent=5 // pred_check
        _
      $region10: #{tpu_custom_call.1} parent=5 // pred_check_branch
        %101 = sbr.rel (%p98) target = $region12
      $region11: #{tpu_custom_call.1} parent=5 // pred_region
        %s102 = ssub.s32 %s15, 1
        // Predicated region
        $region13: #{tpu_custom_call.1} parent=11 // pred_check
          %p103 = pneg %p36
        $region14: #{tpu_custom_call.1} parent=11 // pred_check_branch
          %105 = sbr.rel (%p103) target = $region16
        $region15: #{tpu_custom_call.1} parent=11 // pred_region
          %s107 = ssub.s32 16384, 16384
          %108 = vsyncadd [#allocation3], %s107
          %s109 = sshll.u32 [#allocation2], 4
          %s110 = int_to_ptr.vmem [resolvable:$true] %s109
          %115 = dma.hbm_to_vmem [thread:$0]  %s0, 16384, %s110, [#allocation3], 1024, 1024, 64
        $region16: #{tpu_custom_call.1} parent=11 // pred_fallthru
          _
      $region12: #{tpu_custom_call.1} parent=5 // pred_fallthru
        _
      %p116 = scmp.lt.s32.totalorder %s15, 2
      // Predicated region
      $region17: #{tpu_custom_call.1} parent=5 // pred_check
        %p117 = pneg %p116
      $region18: #{tpu_custom_call.1} parent=5 // pred_check_branch
        %119 = sbr.rel (%p117) target = $region20
      $region19: #{tpu_custom_call.1} parent=5 // pred_region
        // Predicated region
        $region21: #{tpu_custom_call.1} parent=19 // pred_check
          %p120 = pneg %p56
        $region22: #{tpu_custom_call.1} parent=19 // pred_check_branch
          %122 = sbr.rel (%p120) target = $region24
        $region23: #{tpu_custom_call.1} parent=19 // pred_region
          %s123 = sand.u32 %s46, 1
          %s124 = scalar_lea.sflag [#allocation6], %s123
          %s125 = sand.u32 %s46, 1
          %s126 = smul.addr %s125, 4096
          %s127 = scalar_lea.vmem [#allocation5], %s126
          %s128 = smul.u32 4, %s15
          %s130 = ssub.s32 65536, 65536
          %131 = vsyncadd %s124, %s130
          %s132 = smul.addr %s128, 128
          %s133 = scalar_lea.hbm %s1, %s132
          %s134 = sshll.u32 %s127, 4
          %s135 = int_to_ptr.vmem [resolvable:$true] %s134
          %140 = dma.hbm_to_vmem [thread:$0]  %s133, 65536, %s135, %s124, 1024, 512, 32
        $region24: #{tpu_custom_call.1} parent=19 // pred_fallthru
          _
      $region20: #{tpu_custom_call.1} parent=5 // pred_fallthru
        _
      %p141 = scmp.le.s32.totalorder 1, %s15
      %p142 = scmp.lt.s32.totalorder %s15, 3
      %p143 = pnand %p141, %p142
      %p144 = pneg %p143
      // Predicated region
      $region25: #{tpu_custom_call.1} parent=5 // pred_check
        _
      $region26: #{tpu_custom_call.1} parent=5 // pred_check_branch
        %146 = sbr.rel (%p143) target = $region28
      $region27: #{tpu_custom_call.1} parent=5 // pred_region
        %s147 = ssub.s32 %s15, 1
        // Predicated region
        $region29: #{tpu_custom_call.1} parent=27 // pred_check
          %p148 = pneg %p36
        $region30: #{tpu_custom_call.1} parent=27 // pred_check_branch
          %150 = sbr.rel (%p148) target = $region32
        $region31: #{tpu_custom_call.1} parent=27 // pred_region
          %151 = dma.done [#allocation3], 16384
        $region32: #{tpu_custom_call.1} parent=27 // pred_fallthru
          _
        %s152 = sand.u32 %s49, 1
        %s153 = scalar_lea.sflag [#allocation6], %s152
        %s154 = sand.u32 %s49, 1
        %s155 = smul.addr %s154, 4096
        %s156 = scalar_lea.vmem [#allocation5], %s155
        // Predicated region
        $region33: #{tpu_custom_call.1} parent=27 // pred_check
          %p157 = pneg %p62
        $region34: #{tpu_custom_call.1} parent=27 // pred_check_branch
          %159 = sbr.rel (%p157) target = $region36
        $region35: #{tpu_custom_call.1} parent=27 // pred_region
          %160 = dma.done %s153, 65536
        $region36: #{tpu_custom_call.1} parent=27 // pred_fallthru
          _
        %p161 = pneg %p36
        %p162 = pneg %p33
        %s163 = sand.u32 %s49, 1
        %s164 = scalar_lea.sflag [#allocation6], %s163
        %s165 = sand.u32 %s49, 1
        %s166 = smul.addr %s165, 4096
        %s167 = scalar_lea.vmem [#allocation5], %s166
        %p168 = pneg %p62
        %p169 = pneg %p59
        %p170 = pneg %p88
        %p171 = pneg %p85
        %s172 = sand.u32 %s75, 1
        %s173 = scalar_lea.sflag [#allocation4], %s172
        %s174 = sand.u32 %s75, 1
        %s175 = smul.addr %s174, 512
        %s176 = scalar_lea.vmem [#allocation7], %s175
        %s177 = smul.u32 4, %s20
        %s178 = smul.u32 4, %s20
        %v179 = vld [vmem:[#allocation2] sm:$0xff]
        %v180 = vld [vmem:[#allocation2 + $0x8] sm:$0xff]
        %v181 = vld [vmem:[#allocation2 + $0x10] sm:$0xff]
        %v182 = vld [vmem:[#allocation2 + $0x18] sm:$0xff]
        %v183 = vld [vmem:[#allocation2 + $0x20] sm:$0xff]
        %v184 = vld [vmem:[#allocation2 + $0x28] sm:$0xff]
        %v185 = vld [vmem:[#allocation2 + $0x30] sm:$0xff]
        %v186 = vld [vmem:[#allocation2 + $0x38] sm:$0xff]
        %v187 = vld [vmem:[#allocation2 + $0x40] sm:$0xff]
        %v188 = vld [vmem:[#allocation2 + $0x48] sm:$0xff]
        %v189 = vld [vmem:[#allocation2 + $0x50] sm:$0xff]
        %v190 = vld [vmem:[#allocation2 + $0x58] sm:$0xff]
        %v191 = vld [vmem:[#allocation2 + $0x60] sm:$0xff]
        %v192 = vld [vmem:[#allocation2 + $0x68] sm:$0xff]
        %v193 = vld [vmem:[#allocation2 + $0x70] sm:$0xff]
        %v194 = vld [vmem:[#allocation2 + $0x78] sm:$0xff]
        %v195 = vld [vmem:[#allocation2 + $0x80] sm:$0xff]
        %v196 = vld [vmem:[#allocation2 + $0x88] sm:$0xff]
        %v197 = vld [vmem:[#allocation2 + $0x90] sm:$0xff]
        %v198 = vld [vmem:[#allocation2 + $0x98] sm:$0xff]
        %v199 = vld [vmem:[#allocation2 + $0xa0] sm:$0xff]
        %v200 = vld [vmem:[#allocation2 + $0xa8] sm:$0xff]
        %v201 = vld [vmem:[#allocation2 + $0xb0] sm:$0xff]
        %v202 = vld [vmem:[#allocation2 + $0xb8] sm:$0xff]
        %v203 = vld [vmem:[#allocation2 + $0xc0] sm:$0xff]
        %v204 = vld [vmem:[#allocation2 + $0xc8] sm:$0xff]
        %v205 = vld [vmem:[#allocation2 + $0xd0] sm:$0xff]
        %v206 = vld [vmem:[#allocation2 + $0xd8] sm:$0xff]
        %v207 = vld [vmem:[#allocation2 + $0xe0] sm:$0xff]
        %v208 = vld [vmem:[#allocation2 + $0xe8] sm:$0xff]
        %v209 = vld [vmem:[#allocation2 + $0xf0] sm:$0xff]
        %v210 = vld [vmem:[#allocation2 + $0xf8] sm:$0xff]
        %v211 = vld [vmem:[#allocation2 + $0x100] sm:$0xff]
        %v212 = vld [vmem:[#allocation2 + $0x108] sm:$0xff]
        %v213 = vld [vmem:[#allocation2 + $0x110] sm:$0xff]
        %v214 = vld [vmem:[#allocation2 + $0x118] sm:$0xff]
        %v215 = vld [vmem:[#allocation2 + $0x120] sm:$0xff]
        %v216 = vld [vmem:[#allocation2 + $0x128] sm:$0xff]
        %v217 = vld [vmem:[#allocation2 + $0x130] sm:$0xff]
        %v218 = vld [vmem:[#allocation2 + $0x138] sm:$0xff]
        %v219 = vld [vmem:[#allocation2 + $0x140] sm:$0xff]
        %v220 = vld [vmem:[#allocation2 + $0x148] sm:$0xff]
        %v221 = vld [vmem:[#allocation2 + $0x150] sm:$0xff]
        %v222 = vld [vmem:[#allocation2 + $0x158] sm:$0xff]
        %v223 = vld [vmem:[#allocation2 + $0x160] sm:$0xff]
        %v224 = vld [vmem:[#allocation2 + $0x168] sm:$0xff]
        %v225 = vld [vmem:[#allocation2 + $0x170] sm:$0xff]
        %v226 = vld [vmem:[#allocation2 + $0x178] sm:$0xff]
        %v227 = vld [vmem:[#allocation2 + $0x180] sm:$0xff]
        %v228 = vld [vmem:[#allocation2 + $0x188] sm:$0xff]
        %v229 = vld [vmem:[#allocation2 + $0x190] sm:$0xff]
        %v230 = vld [vmem:[#allocation2 + $0x198] sm:$0xff]
        %v231 = vld [vmem:[#allocation2 + $0x1a0] sm:$0xff]
        %v232 = vld [vmem:[#allocation2 + $0x1a8] sm:$0xff]
        %v233 = vld [vmem:[#allocation2 + $0x1b0] sm:$0xff]
        %v234 = vld [vmem:[#allocation2 + $0x1b8] sm:$0xff]
        %v235 = vld [vmem:[#allocation2 + $0x1c0] sm:$0xff]
        %v236 = vld [vmem:[#allocation2 + $0x1c8] sm:$0xff]
        %v237 = vld [vmem:[#allocation2 + $0x1d0] sm:$0xff]
        %v238 = vld [vmem:[#allocation2 + $0x1d8] sm:$0xff]
        %v239 = vld [vmem:[#allocation2 + $0x1e0] sm:$0xff]
        %v240 = vld [vmem:[#allocation2 + $0x1e8] sm:$0xff]
        %v241 = vld [vmem:[#allocation2 + $0x1f0] sm:$0xff]
        %v242 = vld [vmem:[#allocation2 + $0x1f8] sm:$0xff]
        %v243 = vld [vmem:[#allocation2 + $0x200] sm:$0xff]
        %v244 = vld [vmem:[#allocation2 + $0x208] sm:$0xff]
        %v245 = vld [vmem:[#allocation2 + $0x210] sm:$0xff]
        %v246 = vld [vmem:[#allocation2 + $0x218] sm:$0xff]
        %v247 = vld [vmem:[#allocation2 + $0x220] sm:$0xff]
        %v248 = vld [vmem:[#allocation2 + $0x228] sm:$0xff]
        %v249 = vld [vmem:[#allocation2 + $0x230] sm:$0xff]
        %v250 = vld [vmem:[#allocation2 + $0x238] sm:$0xff]
        %v251 = vld [vmem:[#allocation2 + $0x240] sm:$0xff]
        %v252 = vld [vmem:[#allocation2 + $0x248] sm:$0xff]
        %v253 = vld [vmem:[#allocation2 + $0x250] sm:$0xff]
        %v254 = vld [vmem:[#allocation2 + $0x258] sm:$0xff]
        %v255 = vld [vmem:[#allocation2 + $0x260] sm:$0xff]
        %v256 = vld [vmem:[#allocation2 + $0x268] sm:$0xff]
        %v257 = vld [vmem:[#allocation2 + $0x270] sm:$0xff]
        %v258 = vld [vmem:[#allocation2 + $0x278] sm:$0xff]
        %v259 = vld [vmem:[#allocation2 + $0x280] sm:$0xff]
        %v260 = vld [vmem:[#allocation2 + $0x288] sm:$0xff]
        %v261 = vld [vmem:[#allocation2 + $0x290] sm:$0xff]
        %v262 = vld [vmem:[#allocation2 + $0x298] sm:$0xff]
        %v263 = vld [vmem:[#allocation2 + $0x2a0] sm:$0xff]
        %v264 = vld [vmem:[#allocation2 + $0x2a8] sm:$0xff]
        %v265 = vld [vmem:[#allocation2 + $0x2b0] sm:$0xff]
        %v266 = vld [vmem:[#allocation2 + $0x2b8] sm:$0xff]
        %v267 = vld [vmem:[#allocation2 + $0x2c0] sm:$0xff]
        %v268 = vld [vmem:[#allocation2 + $0x2c8] sm:$0xff]
        %v269 = vld [vmem:[#allocation2 + $0x2d0] sm:$0xff]
        %v270 = vld [vmem:[#allocation2 + $0x2d8] sm:$0xff]
        %v271 = vld [vmem:[#allocation2 + $0x2e0] sm:$0xff]
        %v272 = vld [vmem:[#allocation2 + $0x2e8] sm:$0xff]
        %v273 = vld [vmem:[#allocation2 + $0x2f0] sm:$0xff]
        %v274 = vld [vmem:[#allocation2 + $0x2f8] sm:$0xff]
        %v275 = vld [vmem:[#allocation2 + $0x300] sm:$0xff]
        %v276 = vld [vmem:[#allocation2 + $0x308] sm:$0xff]
        %v277 = vld [vmem:[#allocation2 + $0x310] sm:$0xff]
        %v278 = vld [vmem:[#allocation2 + $0x318] sm:$0xff]
        %v279 = vld [vmem:[#allocation2 + $0x320] sm:$0xff]
        %v280 = vld [vmem:[#allocation2 + $0x328] sm:$0xff]
        %v281 = vld [vmem:[#allocation2 + $0x330] sm:$0xff]
        %v282 = vld [vmem:[#allocation2 + $0x338] sm:$0xff]
        %v283 = vld [vmem:[#allocation2 + $0x340] sm:$0xff]
        %v284 = vld [vmem:[#allocation2 + $0x348] sm:$0xff]
        %v285 = vld [vmem:[#allocation2 + $0x350] sm:$0xff]
        %v286 = vld [vmem:[#allocation2 + $0x358] sm:$0xff]
        %v287 = vld [vmem:[#allocation2 + $0x360] sm:$0xff]
        %v288 = vld [vmem:[#allocation2 + $0x368] sm:$0xff]
        %v289 = vld [vmem:[#allocation2 + $0x370] sm:$0xff]
        %v290 = vld [vmem:[#allocation2 + $0x378] sm:$0xff]
        %v291 = vld [vmem:[#allocation2 + $0x380] sm:$0xff]
        %v292 = vld [vmem:[#allocation2 + $0x388] sm:$0xff]
        %v293 = vld [vmem:[#allocation2 + $0x390] sm:$0xff]
        %v294 = vld [vmem:[#allocation2 + $0x398] sm:$0xff]
        %v295 = vld [vmem:[#allocation2 + $0x3a0] sm:$0xff]
        %v296 = vld [vmem:[#allocation2 + $0x3a8] sm:$0xff]
        %v297 = vld [vmem:[#allocation2 + $0x3b0] sm:$0xff]
        %v298 = vld [vmem:[#allocation2 + $0x3b8] sm:$0xff]
        %v299 = vld [vmem:[#allocation2 + $0x3c0] sm:$0xff]
        %v300 = vld [vmem:[#allocation2 + $0x3c8] sm:$0xff]
        %v301 = vld [vmem:[#allocation2 + $0x3d0] sm:$0xff]
        %v302 = vld [vmem:[#allocation2 + $0x3d8] sm:$0xff]
        %v303 = vld [vmem:[#allocation2 + $0x3e0] sm:$0xff]
        %v304 = vld [vmem:[#allocation2 + $0x3e8] sm:$0xff]
        %v305 = vld [vmem:[#allocation2 + $0x3f0] sm:$0xff]
        %v306 = vld [vmem:[#allocation2 + $0x3f8] sm:$0xff]
        %v307 = vld [vmem:[%s156] sm:$0xff]
        %v308 = vld [vmem:[%s156 + $0x8] sm:$0xff]
        %v309 = vld [vmem:[%s156 + $0x10] sm:$0xff]
        %v310 = vld [vmem:[%s156 + $0x18] sm:$0xff]
        %v311 = vld [vmem:[%s156 + $0x20] sm:$0xff]
        %v312 = vld [vmem:[%s156 + $0x28] sm:$0xff]
        %v313 = vld [vmem:[%s156 + $0x30] sm:$0xff]
        %v314 = vld [vmem:[%s156 + $0x38] sm:$0xff]
        %v315 = vld [vmem:[%s156 + $0x40] sm:$0xff]
        %v316 = vld [vmem:[%s156 + $0x48] sm:$0xff]
        %v317 = vld [vmem:[%s156 + $0x50] sm:$0xff]
        %v318 = vld [vmem:[%s156 + $0x58] sm:$0xff]
        %v319 = vld [vmem:[%s156 + $0x60] sm:$0xff]
        %v320 = vld [vmem:[%s156 + $0x68] sm:$0xff]
        %v321 = vld [vmem:[%s156 + $0x70] sm:$0xff]
        %v322 = vld [vmem:[%s156 + $0x78] sm:$0xff]
        %v323 = vld [vmem:[%s156 + $0x80] sm:$0xff]
        %v324 = vld [vmem:[%s156 + $0x88] sm:$0xff]
        %v325 = vld [vmem:[%s156 + $0x90] sm:$0xff]
        %v326 = vld [vmem:[%s156 + $0x98] sm:$0xff]
        %v327 = vld [vmem:[%s156 + $0xa0] sm:$0xff]
        %v328 = vld [vmem:[%s156 + $0xa8] sm:$0xff]
        %v329 = vld [vmem:[%s156 + $0xb0] sm:$0xff]
        %v330 = vld [vmem:[%s156 + $0xb8] sm:$0xff]
        %v331 = vld [vmem:[%s156 + $0xc0] sm:$0xff]
        %v332 = vld [vmem:[%s156 + $0xc8] sm:$0xff]
        %v333 = vld [vmem:[%s156 + $0xd0] sm:$0xff]
        %v334 = vld [vmem:[%s156 + $0xd8] sm:$0xff]
        %v335 = vld [vmem:[%s156 + $0xe0] sm:$0xff]
        %v336 = vld [vmem:[%s156 + $0xe8] sm:$0xff]
        %v337 = vld [vmem:[%s156 + $0xf0] sm:$0xff]
        %v338 = vld [vmem:[%s156 + $0xf8] sm:$0xff]
        %v339 = vld [vmem:[%s156 + $0x100] sm:$0xff]
        %v340 = vld [vmem:[%s156 + $0x108] sm:$0xff]
        %v341 = vld [vmem:[%s156 + $0x110] sm:$0xff]
        %v342 = vld [vmem:[%s156 + $0x118] sm:$0xff]
        %v343 = vld [vmem:[%s156 + $0x120] sm:$0xff]
        %v344 = vld [vmem:[%s156 + $0x128] sm:$0xff]
        %v345 = vld [vmem:[%s156 + $0x130] sm:$0xff]
        %v346 = vld [vmem:[%s156 + $0x138] sm:$0xff]
        %v347 = vld [vmem:[%s156 + $0x140] sm:$0xff]
        %v348 = vld [vmem:[%s156 + $0x148] sm:$0xff]
        %v349 = vld [vmem:[%s156 + $0x150] sm:$0xff]
        %v350 = vld [vmem:[%s156 + $0x158] sm:$0xff]
        %v351 = vld [vmem:[%s156 + $0x160] sm:$0xff]
        %v352 = vld [vmem:[%s156 + $0x168] sm:$0xff]
        %v353 = vld [vmem:[%s156 + $0x170] sm:$0xff]
        %v354 = vld [vmem:[%s156 + $0x178] sm:$0xff]
        %v355 = vld [vmem:[%s156 + $0x180] sm:$0xff]
        %v356 = vld [vmem:[%s156 + $0x188] sm:$0xff]
        %v357 = vld [vmem:[%s156 + $0x190] sm:$0xff]
        %v358 = vld [vmem:[%s156 + $0x198] sm:$0xff]
        %v359 = vld [vmem:[%s156 + $0x1a0] sm:$0xff]
        %v360 = vld [vmem:[%s156 + $0x1a8] sm:$0xff]
        %v361 = vld [vmem:[%s156 + $0x1b0] sm:$0xff]
        %v362 = vld [vmem:[%s156 + $0x1b8] sm:$0xff]
        %v363 = vld [vmem:[%s156 + $0x1c0] sm:$0xff]
        %v364 = vld [vmem:[%s156 + $0x1c8] sm:$0xff]
        %v365 = vld [vmem:[%s156 + $0x1d0] sm:$0xff]
        %v366 = vld [vmem:[%s156 + $0x1d8] sm:$0xff]
        %v367 = vld [vmem:[%s156 + $0x1e0] sm:$0xff]
        %v368 = vld [vmem:[%s156 + $0x1e8] sm:$0xff]
        %v369 = vld [vmem:[%s156 + $0x1f0] sm:$0xff]
        %v370 = vld [vmem:[%s156 + $0x1f8] sm:$0xff]
        %v371 = vld [vmem:[%s156 + $0x200] sm:$0xff]
        %v372 = vld [vmem:[%s156 + $0x208] sm:$0xff]
        %v373 = vld [vmem:[%s156 + $0x210] sm:$0xff]
        %v374 = vld [vmem:[%s156 + $0x218] sm:$0xff]
        %v375 = vld [vmem:[%s156 + $0x220] sm:$0xff]
        %v376 = vld [vmem:[%s156 + $0x228] sm:$0xff]
        %v377 = vld [vmem:[%s156 + $0x230] sm:$0xff]
        %v378 = vld [vmem:[%s156 + $0x238] sm:$0xff]
        %v379 = vld [vmem:[%s156 + $0x240] sm:$0xff]
        %v380 = vld [vmem:[%s156 + $0x248] sm:$0xff]
        %v381 = vld [vmem:[%s156 + $0x250] sm:$0xff]
        %v382 = vld [vmem:[%s156 + $0x258] sm:$0xff]
        %v383 = vld [vmem:[%s156 + $0x260] sm:$0xff]
        %v384 = vld [vmem:[%s156 + $0x268] sm:$0xff]
        %v385 = vld [vmem:[%s156 + $0x270] sm:$0xff]
        %v386 = vld [vmem:[%s156 + $0x278] sm:$0xff]
        %v387 = vld [vmem:[%s156 + $0x280] sm:$0xff]
        %v388 = vld [vmem:[%s156 + $0x288] sm:$0xff]
        %v389 = vld [vmem:[%s156 + $0x290] sm:$0xff]
        %v390 = vld [vmem:[%s156 + $0x298] sm:$0xff]
        %v391 = vld [vmem:[%s156 + $0x2a0] sm:$0xff]
        %v392 = vld [vmem:[%s156 + $0x2a8] sm:$0xff]
        %v393 = vld [vmem:[%s156 + $0x2b0] sm:$0xff]
        %v394 = vld [vmem:[%s156 + $0x2b8] sm:$0xff]
        %v395 = vld [vmem:[%s156 + $0x2c0] sm:$0xff]
        %v396 = vld [vmem:[%s156 + $0x2c8] sm:$0xff]
        %v397 = vld [vmem:[%s156 + $0x2d0] sm:$0xff]
        %v398 = vld [vmem:[%s156 + $0x2d8] sm:$0xff]
        %v399 = vld [vmem:[%s156 + $0x2e0] sm:$0xff]
        %v400 = vld [vmem:[%s156 + $0x2e8] sm:$0xff]
        %v401 = vld [vmem:[%s156 + $0x2f0] sm:$0xff]
        %v402 = vld [vmem:[%s156 + $0x2f8] sm:$0xff]
        %v403 = vld [vmem:[%s156 + $0x300] sm:$0xff]
        %v404 = vld [vmem:[%s156 + $0x308] sm:$0xff]
        %v405 = vld [vmem:[%s156 + $0x310] sm:$0xff]
        %v406 = vld [vmem:[%s156 + $0x318] sm:$0xff]
        %v407 = vld [vmem:[%s156 + $0x320] sm:$0xff]
        %v408 = vld [vmem:[%s156 + $0x328] sm:$0xff]
        %v409 = vld [vmem:[%s156 + $0x330] sm:$0xff]
        %v410 = vld [vmem:[%s156 + $0x338] sm:$0xff]
        %v411 = vld [vmem:[%s156 + $0x340] sm:$0xff]
        %v412 = vld [vmem:[%s156 + $0x348] sm:$0xff]
        %v413 = vld [vmem:[%s156 + $0x350] sm:$0xff]
        %v414 = vld [vmem:[%s156 + $0x358] sm:$0xff]
        %v415 = vld [vmem:[%s156 + $0x360] sm:$0xff]
        %v416 = vld [vmem:[%s156 + $0x368] sm:$0xff]
        %v417 = vld [vmem:[%s156 + $0x370] sm:$0xff]
        %v418 = vld [vmem:[%s156 + $0x378] sm:$0xff]
        %v419 = vld [vmem:[%s156 + $0x380] sm:$0xff]
        %v420 = vld [vmem:[%s156 + $0x388] sm:$0xff]
        %v421 = vld [vmem:[%s156 + $0x390] sm:$0xff]
        %v422 = vld [vmem:[%s156 + $0x398] sm:$0xff]
        %v423 = vld [vmem:[%s156 + $0x3a0] sm:$0xff]
        %v424 = vld [vmem:[%s156 + $0x3a8] sm:$0xff]
        %v425 = vld [vmem:[%s156 + $0x3b0] sm:$0xff]
        %v426 = vld [vmem:[%s156 + $0x3b8] sm:$0xff]
        %v427 = vld [vmem:[%s156 + $0x3c0] sm:$0xff]
        %v428 = vld [vmem:[%s156 + $0x3c8] sm:$0xff]
        %v429 = vld [vmem:[%s156 + $0x3d0] sm:$0xff]
        %v430 = vld [vmem:[%s156 + $0x3d8] sm:$0xff]
        %v431 = vld [vmem:[%s156 + $0x3e0] sm:$0xff]
        %v432 = vld [vmem:[%s156 + $0x3e8] sm:$0xff]
        %v433 = vld [vmem:[%s156 + $0x3f0] sm:$0xff]
        %v434 = vld [vmem:[%s156 + $0x3f8] sm:$0xff]
        %v435 = vld [vmem:[%s156 + $0x400] sm:$0xff]
        %v436 = vld [vmem:[%s156 + $0x408] sm:$0xff]
        %v437 = vld [vmem:[%s156 + $0x410] sm:$0xff]
        %v438 = vld [vmem:[%s156 + $0x418] sm:$0xff]
        %v439 = vld [vmem:[%s156 + $0x420] sm:$0xff]
        %v440 = vld [vmem:[%s156 + $0x428] sm:$0xff]
        %v441 = vld [vmem:[%s156 + $0x430] sm:$0xff]
        %v442 = vld [vmem:[%s156 + $0x438] sm:$0xff]
        %v443 = vld [vmem:[%s156 + $0x440] sm:$0xff]
        %v444 = vld [vmem:[%s156 + $0x448] sm:$0xff]
        %v445 = vld [vmem:[%s156 + $0x450] sm:$0xff]
        %v446 = vld [vmem:[%s156 + $0x458] sm:$0xff]
        %v447 = vld [vmem:[%s156 + $0x460] sm:$0xff]
        %v448 = vld [vmem:[%s156 + $0x468] sm:$0xff]
        %v449 = vld [vmem:[%s156 + $0x470] sm:$0xff]
        %v450 = vld [vmem:[%s156 + $0x478] sm:$0xff]
        %v451 = vld [vmem:[%s156 + $0x480] sm:$0xff]
        %v452 = vld [vmem:[%s156 + $0x488] sm:$0xff]
        %v453 = vld [vmem:[%s156 + $0x490] sm:$0xff]
        %v454 = vld [vmem:[%s156 + $0x498] sm:$0xff]
        %v455 = vld [vmem:[%s156 + $0x4a0] sm:$0xff]
        %v456 = vld [vmem:[%s156 + $0x4a8] sm:$0xff]
        %v457 = vld [vmem:[%s156 + $0x4b0] sm:$0xff]
        %v458 = vld [vmem:[%s156 + $0x4b8] sm:$0xff]
        %v459 = vld [vmem:[%s156 + $0x4c0] sm:$0xff]
        %v460 = vld [vmem:[%s156 + $0x4c8] sm:$0xff]
        %v461 = vld [vmem:[%s156 + $0x4d0] sm:$0xff]
        %v462 = vld [vmem:[%s156 + $0x4d8] sm:$0xff]
        %v463 = vld [vmem:[%s156 + $0x4e0] sm:$0xff]
        %v464 = vld [vmem:[%s156 + $0x4e8] sm:$0xff]
        %v465 = vld [vmem:[%s156 + $0x4f0] sm:$0xff]
        %v466 = vld [vmem:[%s156 + $0x4f8] sm:$0xff]
        %v467 = vld [vmem:[%s156 + $0x500] sm:$0xff]
        %v468 = vld [vmem:[%s156 + $0x508] sm:$0xff]
        %v469 = vld [vmem:[%s156 + $0x510] sm:$0xff]
        %v470 = vld [vmem:[%s156 + $0x518] sm:$0xff]
        %v471 = vld [vmem:[%s156 + $0x520] sm:$0xff]
        %v472 = vld [vmem:[%s156 + $0x528] sm:$0xff]
        %v473 = vld [vmem:[%s156 + $0x530] sm:$0xff]
        %v474 = vld [vmem:[%s156 + $0x538] sm:$0xff]
        %v475 = vld [vmem:[%s156 + $0x540] sm:$0xff]
        %v476 = vld [vmem:[%s156 + $0x548] sm:$0xff]
        %v477 = vld [vmem:[%s156 + $0x550] sm:$0xff]
        %v478 = vld [vmem:[%s156 + $0x558] sm:$0xff]
        %v479 = vld [vmem:[%s156 + $0x560] sm:$0xff]
        %v480 = vld [vmem:[%s156 + $0x568] sm:$0xff]
        %v481 = vld [vmem:[%s156 + $0x570] sm:$0xff]
        %v482 = vld [vmem:[%s156 + $0x578] sm:$0xff]
        %v483 = vld [vmem:[%s156 + $0x580] sm:$0xff]
        %v484 = vld [vmem:[%s156 + $0x588] sm:$0xff]
        %v485 = vld [vmem:[%s156 + $0x590] sm:$0xff]
        %v486 = vld [vmem:[%s156 + $0x598] sm:$0xff]
        %v487 = vld [vmem:[%s156 + $0x5a0] sm:$0xff]
        %v488 = vld [vmem:[%s156 + $0x5a8] sm:$0xff]
        %v489 = vld [vmem:[%s156 + $0x5b0] sm:$0xff]
        %v490 = vld [vmem:[%s156 + $0x5b8] sm:$0xff]
        %v491 = vld [vmem:[%s156 + $0x5c0] sm:$0xff]
        %v492 = vld [vmem:[%s156 + $0x5c8] sm:$0xff]
        %v493 = vld [vmem:[%s156 + $0x5d0] sm:$0xff]
        %v494 = vld [vmem:[%s156 + $0x5d8] sm:$0xff]
        %v495 = vld [vmem:[%s156 + $0x5e0] sm:$0xff]
        %v496 = vld [vmem:[%s156 + $0x5e8] sm:$0xff]
        %v497 = vld [vmem:[%s156 + $0x5f0] sm:$0xff]
        %v498 = vld [vmem:[%s156 + $0x5f8] sm:$0xff]
        %v499 = vld [vmem:[%s156 + $0x600] sm:$0xff]
        %v500 = vld [vmem:[%s156 + $0x608] sm:$0xff]
        %v501 = vld [vmem:[%s156 + $0x610] sm:$0xff]
        %v502 = vld [vmem:[%s156 + $0x618] sm:$0xff]
        %v503 = vld [vmem:[%s156 + $0x620] sm:$0xff]
        %v504 = vld [vmem:[%s156 + $0x628] sm:$0xff]
        %v505 = vld [vmem:[%s156 + $0x630] sm:$0xff]
        %v506 = vld [vmem:[%s156 + $0x638] sm:$0xff]
        %v507 = vld [vmem:[%s156 + $0x640] sm:$0xff]
        %v508 = vld [vmem:[%s156 + $0x648] sm:$0xff]
        %v509 = vld [vmem:[%s156 + $0x650] sm:$0xff]
        %v510 = vld [vmem:[%s156 + $0x658] sm:$0xff]
        %v511 = vld [vmem:[%s156 + $0x660] sm:$0xff]
        %v512 = vld [vmem:[%s156 + $0x668] sm:$0xff]
        %v513 = vld [vmem:[%s156 + $0x670] sm:$0xff]
        %v514 = vld [vmem:[%s156 + $0x678] sm:$0xff]
        %v515 = vld [vmem:[%s156 + $0x680] sm:$0xff]
        %v516 = vld [vmem:[%s156 + $0x688] sm:$0xff]
        %v517 = vld [vmem:[%s156 + $0x690] sm:$0xff]
        %v518 = vld [vmem:[%s156 + $0x698] sm:$0xff]
        %v519 = vld [vmem:[%s156 + $0x6a0] sm:$0xff]
        %v520 = vld [vmem:[%s156 + $0x6a8] sm:$0xff]
        %v521 = vld [vmem:[%s156 + $0x6b0] sm:$0xff]
        %v522 = vld [vmem:[%s156 + $0x6b8] sm:$0xff]
        %v523 = vld [vmem:[%s156 + $0x6c0] sm:$0xff]
        %v524 = vld [vmem:[%s156 + $0x6c8] sm:$0xff]
        %v525 = vld [vmem:[%s156 + $0x6d0] sm:$0xff]
        %v526 = vld [vmem:[%s156 + $0x6d8] sm:$0xff]
        %v527 = vld [vmem:[%s156 + $0x6e0] sm:$0xff]
        %v528 = vld [vmem:[%s156 + $0x6e8] sm:$0xff]
        %v529 = vld [vmem:[%s156 + $0x6f0] sm:$0xff]
        %v530 = vld [vmem:[%s156 + $0x6f8] sm:$0xff]
        %v531 = vld [vmem:[%s156 + $0x700] sm:$0xff]
        %v532 = vld [vmem:[%s156 + $0x708] sm:$0xff]
        %v533 = vld [vmem:[%s156 + $0x710] sm:$0xff]
        %v534 = vld [vmem:[%s156 + $0x718] sm:$0xff]
        %v535 = vld [vmem:[%s156 + $0x720] sm:$0xff]
        %v536 = vld [vmem:[%s156 + $0x728] sm:$0xff]
        %v537 = vld [vmem:[%s156 + $0x730] sm:$0xff]
        %v538 = vld [vmem:[%s156 + $0x738] sm:$0xff]
        %v539 = vld [vmem:[%s156 + $0x740] sm:$0xff]
        %v540 = vld [vmem:[%s156 + $0x748] sm:$0xff]
        %v541 = vld [vmem:[%s156 + $0x750] sm:$0xff]
        %v542 = vld [vmem:[%s156 + $0x758] sm:$0xff]
        %v543 = vld [vmem:[%s156 + $0x760] sm:$0xff]
        %v544 = vld [vmem:[%s156 + $0x768] sm:$0xff]
        %v545 = vld [vmem:[%s156 + $0x770] sm:$0xff]
        %v546 = vld [vmem:[%s156 + $0x778] sm:$0xff]
        %v547 = vld [vmem:[%s156 + $0x780] sm:$0xff]
        %v548 = vld [vmem:[%s156 + $0x788] sm:$0xff]
        %v549 = vld [vmem:[%s156 + $0x790] sm:$0xff]
        %v550 = vld [vmem:[%s156 + $0x798] sm:$0xff]
        %v551 = vld [vmem:[%s156 + $0x7a0] sm:$0xff]
        %v552 = vld [vmem:[%s156 + $0x7a8] sm:$0xff]
        %v553 = vld [vmem:[%s156 + $0x7b0] sm:$0xff]
        %v554 = vld [vmem:[%s156 + $0x7b8] sm:$0xff]
        %v555 = vld [vmem:[%s156 + $0x7c0] sm:$0xff]
        %v556 = vld [vmem:[%s156 + $0x7c8] sm:$0xff]
        %v557 = vld [vmem:[%s156 + $0x7d0] sm:$0xff]
        %v558 = vld [vmem:[%s156 + $0x7d8] sm:$0xff]
        %v559 = vld [vmem:[%s156 + $0x7e0] sm:$0xff]
        %v560 = vld [vmem:[%s156 + $0x7e8] sm:$0xff]
        %v561 = vld [vmem:[%s156 + $0x7f0] sm:$0xff]
        %v562 = vld [vmem:[%s156 + $0x7f8] sm:$0xff]
        %v563 = vld [vmem:[%s156 + $0x800] sm:$0xff]
        %v564 = vld [vmem:[%s156 + $0x808] sm:$0xff]
        %v565 = vld [vmem:[%s156 + $0x810] sm:$0xff]
        %v566 = vld [vmem:[%s156 + $0x818] sm:$0xff]
        %v567 = vld [vmem:[%s156 + $0x820] sm:$0xff]
        %v568 = vld [vmem:[%s156 + $0x828] sm:$0xff]
        %v569 = vld [vmem:[%s156 + $0x830] sm:$0xff]
        %v570 = vld [vmem:[%s156 + $0x838] sm:$0xff]
        %v571 = vld [vmem:[%s156 + $0x840] sm:$0xff]
        %v572 = vld [vmem:[%s156 + $0x848] sm:$0xff]
        %v573 = vld [vmem:[%s156 + $0x850] sm:$0xff]
        %v574 = vld [vmem:[%s156 + $0x858] sm:$0xff]
        %v575 = vld [vmem:[%s156 + $0x860] sm:$0xff]
        %v576 = vld [vmem:[%s156 + $0x868] sm:$0xff]
        %v577 = vld [vmem:[%s156 + $0x870] sm:$0xff]
        %v578 = vld [vmem:[%s156 + $0x878] sm:$0xff]
        %v579 = vld [vmem:[%s156 + $0x880] sm:$0xff]
        %v580 = vld [vmem:[%s156 + $0x888] sm:$0xff]
        %v581 = vld [vmem:[%s156 + $0x890] sm:$0xff]
        %v582 = vld [vmem:[%s156 + $0x898] sm:$0xff]
        %v583 = vld [vmem:[%s156 + $0x8a0] sm:$0xff]
        %v584 = vld [vmem:[%s156 + $0x8a8] sm:$0xff]
        %v585 = vld [vmem:[%s156 + $0x8b0] sm:$0xff]
        %v586 = vld [vmem:[%s156 + $0x8b8] sm:$0xff]
        %v587 = vld [vmem:[%s156 + $0x8c0] sm:$0xff]
        %v588 = vld [vmem:[%s156 + $0x8c8] sm:$0xff]
        %v589 = vld [vmem:[%s156 + $0x8d0] sm:$0xff]
        %v590 = vld [vmem:[%s156 + $0x8d8] sm:$0xff]
        %v591 = vld [vmem:[%s156 + $0x8e0] sm:$0xff]
        %v592 = vld [vmem:[%s156 + $0x8e8] sm:$0xff]
        %v593 = vld [vmem:[%s156 + $0x8f0] sm:$0xff]
        %v594 = vld [vmem:[%s156 + $0x8f8] sm:$0xff]
        %v595 = vld [vmem:[%s156 + $0x900] sm:$0xff]
        %v596 = vld [vmem:[%s156 + $0x908] sm:$0xff]
        %v597 = vld [vmem:[%s156 + $0x910] sm:$0xff]
        %v598 = vld [vmem:[%s156 + $0x918] sm:$0xff]
        %v599 = vld [vmem:[%s156 + $0x920] sm:$0xff]
        %v600 = vld [vmem:[%s156 + $0x928] sm:$0xff]
        %v601 = vld [vmem:[%s156 + $0x930] sm:$0xff]
        %v602 = vld [vmem:[%s156 + $0x938] sm:$0xff]
        %v603 = vld [vmem:[%s156 + $0x940] sm:$0xff]
        %v604 = vld [vmem:[%s156 + $0x948] sm:$0xff]
        %v605 = vld [vmem:[%s156 + $0x950] sm:$0xff]
        %v606 = vld [vmem:[%s156 + $0x958] sm:$0xff]
        %v607 = vld [vmem:[%s156 + $0x960] sm:$0xff]
        %v608 = vld [vmem:[%s156 + $0x968] sm:$0xff]
        %v609 = vld [vmem:[%s156 + $0x970] sm:$0xff]
        %v610 = vld [vmem:[%s156 + $0x978] sm:$0xff]
        %v611 = vld [vmem:[%s156 + $0x980] sm:$0xff]
        %v612 = vld [vmem:[%s156 + $0x988] sm:$0xff]
        %v613 = vld [vmem:[%s156 + $0x990] sm:$0xff]
        %v614 = vld [vmem:[%s156 + $0x998] sm:$0xff]
        %v615 = vld [vmem:[%s156 + $0x9a0] sm:$0xff]
        %v616 = vld [vmem:[%s156 + $0x9a8] sm:$0xff]
        %v617 = vld [vmem:[%s156 + $0x9b0] sm:$0xff]
        %v618 = vld [vmem:[%s156 + $0x9b8] sm:$0xff]
        %v619 = vld [vmem:[%s156 + $0x9c0] sm:$0xff]
        %v620 = vld [vmem:[%s156 + $0x9c8] sm:$0xff]
        %v621 = vld [vmem:[%s156 + $0x9d0] sm:$0xff]
        %v622 = vld [vmem:[%s156 + $0x9d8] sm:$0xff]
        %v623 = vld [vmem:[%s156 + $0x9e0] sm:$0xff]
        %v624 = vld [vmem:[%s156 + $0x9e8] sm:$0xff]
        %v625 = vld [vmem:[%s156 + $0x9f0] sm:$0xff]
        %v626 = vld [vmem:[%s156 + $0x9f8] sm:$0xff]
        %v627 = vld [vmem:[%s156 + $0xa00] sm:$0xff]
        %v628 = vld [vmem:[%s156 + $0xa08] sm:$0xff]
        %v629 = vld [vmem:[%s156 + $0xa10] sm:$0xff]
        %v630 = vld [vmem:[%s156 + $0xa18] sm:$0xff]
        %v631 = vld [vmem:[%s156 + $0xa20] sm:$0xff]
        %v632 = vld [vmem:[%s156 + $0xa28] sm:$0xff]
        %v633 = vld [vmem:[%s156 + $0xa30] sm:$0xff]
        %v634 = vld [vmem:[%s156 + $0xa38] sm:$0xff]
        %v635 = vld [vmem:[%s156 + $0xa40] sm:$0xff]
        %v636 = vld [vmem:[%s156 + $0xa48] sm:$0xff]
        %v637 = vld [vmem:[%s156 + $0xa50] sm:$0xff]
        %v638 = vld [vmem:[%s156 + $0xa58] sm:$0xff]
        %v639 = vld [vmem:[%s156 + $0xa60] sm:$0xff]
        %v640 = vld [vmem:[%s156 + $0xa68] sm:$0xff]
        %v641 = vld [vmem:[%s156 + $0xa70] sm:$0xff]
        %v642 = vld [vmem:[%s156 + $0xa78] sm:$0xff]
        %v643 = vld [vmem:[%s156 + $0xa80] sm:$0xff]
        %v644 = vld [vmem:[%s156 + $0xa88] sm:$0xff]
        %v645 = vld [vmem:[%s156 + $0xa90] sm:$0xff]
        %v646 = vld [vmem:[%s156 + $0xa98] sm:$0xff]
        %v647 = vld [vmem:[%s156 + $0xaa0] sm:$0xff]
        %v648 = vld [vmem:[%s156 + $0xaa8] sm:$0xff]
        %v649 = vld [vmem:[%s156 + $0xab0] sm:$0xff]
        %v650 = vld [vmem:[%s156 + $0xab8] sm:$0xff]
        %v651 = vld [vmem:[%s156 + $0xac0] sm:$0xff]
        %v652 = vld [vmem:[%s156 + $0xac8] sm:$0xff]
        %v653 = vld [vmem:[%s156 + $0xad0] sm:$0xff]
        %v654 = vld [vmem:[%s156 + $0xad8] sm:$0xff]
        %v655 = vld [vmem:[%s156 + $0xae0] sm:$0xff]
        %v656 = vld [vmem:[%s156 + $0xae8] sm:$0xff]
        %v657 = vld [vmem:[%s156 + $0xaf0] sm:$0xff]
        %v658 = vld [vmem:[%s156 + $0xaf8] sm:$0xff]
        %v659 = vld [vmem:[%s156 + $0xb00] sm:$0xff]
        %v660 = vld [vmem:[%s156 + $0xb08] sm:$0xff]
        %v661 = vld [vmem:[%s156 + $0xb10] sm:$0xff]
        %v662 = vld [vmem:[%s156 + $0xb18] sm:$0xff]
        %v663 = vld [vmem:[%s156 + $0xb20] sm:$0xff]
        %v664 = vld [vmem:[%s156 + $0xb28] sm:$0xff]
        %v665 = vld [vmem:[%s156 + $0xb30] sm:$0xff]
        %v666 = vld [vmem:[%s156 + $0xb38] sm:$0xff]
        %v667 = vld [vmem:[%s156 + $0xb40] sm:$0xff]
        %v668 = vld [vmem:[%s156 + $0xb48] sm:$0xff]
        %v669 = vld [vmem:[%s156 + $0xb50] sm:$0xff]
        %v670 = vld [vmem:[%s156 + $0xb58] sm:$0xff]
        %v671 = vld [vmem:[%s156 + $0xb60] sm:$0xff]
        %v672 = vld [vmem:[%s156 + $0xb68] sm:$0xff]
        %v673 = vld [vmem:[%s156 + $0xb70] sm:$0xff]
        %v674 = vld [vmem:[%s156 + $0xb78] sm:$0xff]
        %v675 = vld [vmem:[%s156 + $0xb80] sm:$0xff]
        %v676 = vld [vmem:[%s156 + $0xb88] sm:$0xff]
        %v677 = vld [vmem:[%s156 + $0xb90] sm:$0xff]
        %v678 = vld [vmem:[%s156 + $0xb98] sm:$0xff]
        %v679 = vld [vmem:[%s156 + $0xba0] sm:$0xff]
        %v680 = vld [vmem:[%s156 + $0xba8] sm:$0xff]
        %v681 = vld [vmem:[%s156 + $0xbb0] sm:$0xff]
        %v682 = vld [vmem:[%s156 + $0xbb8] sm:$0xff]
        %v683 = vld [vmem:[%s156 + $0xbc0] sm:$0xff]
        %v684 = vld [vmem:[%s156 + $0xbc8] sm:$0xff]
        %v685 = vld [vmem:[%s156 + $0xbd0] sm:$0xff]
        %v686 = vld [vmem:[%s156 + $0xbd8] sm:$0xff]
        %v687 = vld [vmem:[%s156 + $0xbe0] sm:$0xff]
        %v688 = vld [vmem:[%s156 + $0xbe8] sm:$0xff]
        %v689 = vld [vmem:[%s156 + $0xbf0] sm:$0xff]
        %v690 = vld [vmem:[%s156 + $0xbf8] sm:$0xff]
        %v691 = vld [vmem:[%s156 + $0xc00] sm:$0xff]
        %v692 = vld [vmem:[%s156 + $0xc08] sm:$0xff]
        %v693 = vld [vmem:[%s156 + $0xc10] sm:$0xff]
        %v694 = vld [vmem:[%s156 + $0xc18] sm:$0xff]
        %v695 = vld [vmem:[%s156 + $0xc20] sm:$0xff]
        %v696 = vld [vmem:[%s156 + $0xc28] sm:$0xff]
        %v697 = vld [vmem:[%s156 + $0xc30] sm:$0xff]
        %v698 = vld [vmem:[%s156 + $0xc38] sm:$0xff]
        %v699 = vld [vmem:[%s156 + $0xc40] sm:$0xff]
        %v700 = vld [vmem:[%s156 + $0xc48] sm:$0xff]
        %v701 = vld [vmem:[%s156 + $0xc50] sm:$0xff]
        %v702 = vld [vmem:[%s156 + $0xc58] sm:$0xff]
        %v703 = vld [vmem:[%s156 + $0xc60] sm:$0xff]
        %v704 = vld [vmem:[%s156 + $0xc68] sm:$0xff]
        %v705 = vld [vmem:[%s156 + $0xc70] sm:$0xff]
        %v706 = vld [vmem:[%s156 + $0xc78] sm:$0xff]
        %v707 = vld [vmem:[%s156 + $0xc80] sm:$0xff]
        %v708 = vld [vmem:[%s156 + $0xc88] sm:$0xff]
        %v709 = vld [vmem:[%s156 + $0xc90] sm:$0xff]
        %v710 = vld [vmem:[%s156 + $0xc98] sm:$0xff]
        %v711 = vld [vmem:[%s156 + $0xca0] sm:$0xff]
        %v712 = vld [vmem:[%s156 + $0xca8] sm:$0xff]
        %v713 = vld [vmem:[%s156 + $0xcb0] sm:$0xff]
        %v714 = vld [vmem:[%s156 + $0xcb8] sm:$0xff]
        %v715 = vld [vmem:[%s156 + $0xcc0] sm:$0xff]
        %v716 = vld [vmem:[%s156 + $0xcc8] sm:$0xff]
        %v717 = vld [vmem:[%s156 + $0xcd0] sm:$0xff]
        %v718 = vld [vmem:[%s156 + $0xcd8] sm:$0xff]
        %v719 = vld [vmem:[%s156 + $0xce0] sm:$0xff]
        %v720 = vld [vmem:[%s156 + $0xce8] sm:$0xff]
        %v721 = vld [vmem:[%s156 + $0xcf0] sm:$0xff]
        %v722 = vld [vmem:[%s156 + $0xcf8] sm:$0xff]
        %v723 = vld [vmem:[%s156 + $0xd00] sm:$0xff]
        %v724 = vld [vmem:[%s156 + $0xd08] sm:$0xff]
        %v725 = vld [vmem:[%s156 + $0xd10] sm:$0xff]
        %v726 = vld [vmem:[%s156 + $0xd18] sm:$0xff]
        %v727 = vld [vmem:[%s156 + $0xd20] sm:$0xff]
        %v728 = vld [vmem:[%s156 + $0xd28] sm:$0xff]
        %v729 = vld [vmem:[%s156 + $0xd30] sm:$0xff]
        %v730 = vld [vmem:[%s156 + $0xd38] sm:$0xff]
        %v731 = vld [vmem:[%s156 + $0xd40] sm:$0xff]
        %v732 = vld [vmem:[%s156 + $0xd48] sm:$0xff]
        %v733 = vld [vmem:[%s156 + $0xd50] sm:$0xff]
        %v734 = vld [vmem:[%s156 + $0xd58] sm:$0xff]
        %v735 = vld [vmem:[%s156 + $0xd60] sm:$0xff]
        %v736 = vld [vmem:[%s156 + $0xd68] sm:$0xff]
        %v737 = vld [vmem:[%s156 + $0xd70] sm:$0xff]
        %v738 = vld [vmem:[%s156 + $0xd78] sm:$0xff]
        %v739 = vld [vmem:[%s156 + $0xd80] sm:$0xff]
        %v740 = vld [vmem:[%s156 + $0xd88] sm:$0xff]
        %v741 = vld [vmem:[%s156 + $0xd90] sm:$0xff]
        %v742 = vld [vmem:[%s156 + $0xd98] sm:$0xff]
        %v743 = vld [vmem:[%s156 + $0xda0] sm:$0xff]
        %v744 = vld [vmem:[%s156 + $0xda8] sm:$0xff]
        %v745 = vld [vmem:[%s156 + $0xdb0] sm:$0xff]
        %v746 = vld [vmem:[%s156 + $0xdb8] sm:$0xff]
        %v747 = vld [vmem:[%s156 + $0xdc0] sm:$0xff]
        %v748 = vld [vmem:[%s156 + $0xdc8] sm:$0xff]
        %v749 = vld [vmem:[%s156 + $0xdd0] sm:$0xff]
        %v750 = vld [vmem:[%s156 + $0xdd8] sm:$0xff]
        %v751 = vld [vmem:[%s156 + $0xde0] sm:$0xff]
        %v752 = vld [vmem:[%s156 + $0xde8] sm:$0xff]
        %v753 = vld [vmem:[%s156 + $0xdf0] sm:$0xff]
        %v754 = vld [vmem:[%s156 + $0xdf8] sm:$0xff]
        %v755 = vld [vmem:[%s156 + $0xe00] sm:$0xff]
        %v756 = vld [vmem:[%s156 + $0xe08] sm:$0xff]
        %v757 = vld [vmem:[%s156 + $0xe10] sm:$0xff]
        %v758 = vld [vmem:[%s156 + $0xe18] sm:$0xff]
        %v759 = vld [vmem:[%s156 + $0xe20] sm:$0xff]
        %v760 = vld [vmem:[%s156 + $0xe28] sm:$0xff]
        %v761 = vld [vmem:[%s156 + $0xe30] sm:$0xff]
        %v762 = vld [vmem:[%s156 + $0xe38] sm:$0xff]
        %v763 = vld [vmem:[%s156 + $0xe40] sm:$0xff]
        %v764 = vld [vmem:[%s156 + $0xe48] sm:$0xff]
        %v765 = vld [vmem:[%s156 + $0xe50] sm:$0xff]
        %v766 = vld [vmem:[%s156 + $0xe58] sm:$0xff]
        %v767 = vld [vmem:[%s156 + $0xe60] sm:$0xff]
        %v768 = vld [vmem:[%s156 + $0xe68] sm:$0xff]
        %v769 = vld [vmem:[%s156 + $0xe70] sm:$0xff]
        %v770 = vld [vmem:[%s156 + $0xe78] sm:$0xff]
        %v771 = vld [vmem:[%s156 + $0xe80] sm:$0xff]
        %v772 = vld [vmem:[%s156 + $0xe88] sm:$0xff]
        %v773 = vld [vmem:[%s156 + $0xe90] sm:$0xff]
        %v774 = vld [vmem:[%s156 + $0xe98] sm:$0xff]
        %v775 = vld [vmem:[%s156 + $0xea0] sm:$0xff]
        %v776 = vld [vmem:[%s156 + $0xea8] sm:$0xff]
        %v777 = vld [vmem:[%s156 + $0xeb0] sm:$0xff]
        %v778 = vld [vmem:[%s156 + $0xeb8] sm:$0xff]
        %v779 = vld [vmem:[%s156 + $0xec0] sm:$0xff]
        %v780 = vld [vmem:[%s156 + $0xec8] sm:$0xff]
        %v781 = vld [vmem:[%s156 + $0xed0] sm:$0xff]
        %v782 = vld [vmem:[%s156 + $0xed8] sm:$0xff]
        %v783 = vld [vmem:[%s156 + $0xee0] sm:$0xff]
        %v784 = vld [vmem:[%s156 + $0xee8] sm:$0xff]
        %v785 = vld [vmem:[%s156 + $0xef0] sm:$0xff]
        %v786 = vld [vmem:[%s156 + $0xef8] sm:$0xff]
        %v787 = vld [vmem:[%s156 + $0xf00] sm:$0xff]
        %v788 = vld [vmem:[%s156 + $0xf08] sm:$0xff]
        %v789 = vld [vmem:[%s156 + $0xf10] sm:$0xff]
        %v790 = vld [vmem:[%s156 + $0xf18] sm:$0xff]
        %v791 = vld [vmem:[%s156 + $0xf20] sm:$0xff]
        %v792 = vld [vmem:[%s156 + $0xf28] sm:$0xff]
        %v793 = vld [vmem:[%s156 + $0xf30] sm:$0xff]
        %v794 = vld [vmem:[%s156 + $0xf38] sm:$0xff]
        %v795 = vld [vmem:[%s156 + $0xf40] sm:$0xff]
        %v796 = vld [vmem:[%s156 + $0xf48] sm:$0xff]
        %v797 = vld [vmem:[%s156 + $0xf50] sm:$0xff]
        %v798 = vld [vmem:[%s156 + $0xf58] sm:$0xff]
        %v799 = vld [vmem:[%s156 + $0xf60] sm:$0xff]
        %v800 = vld [vmem:[%s156 + $0xf68] sm:$0xff]
        %v801 = vld [vmem:[%s156 + $0xf70] sm:$0xff]
        %v802 = vld [vmem:[%s156 + $0xf78] sm:$0xff]
        %v803 = vld [vmem:[%s156 + $0xf80] sm:$0xff]
        %v804 = vld [vmem:[%s156 + $0xf88] sm:$0xff]
        %v805 = vld [vmem:[%s156 + $0xf90] sm:$0xff]
        %v806 = vld [vmem:[%s156 + $0xf98] sm:$0xff]
        %v807 = vld [vmem:[%s156 + $0xfa0] sm:$0xff]
        %v808 = vld [vmem:[%s156 + $0xfa8] sm:$0xff]
        %v809 = vld [vmem:[%s156 + $0xfb0] sm:$0xff]
        %v810 = vld [vmem:[%s156 + $0xfb8] sm:$0xff]
        %v811 = vld [vmem:[%s156 + $0xfc0] sm:$0xff]
        %v812 = vld [vmem:[%s156 + $0xfc8] sm:$0xff]
        %v813 = vld [vmem:[%s156 + $0xfd0] sm:$0xff]
        %v814 = vld [vmem:[%s156 + $0xfd8] sm:$0xff]
        %v815 = vld [vmem:[%s156 + $0xfe0] sm:$0xff]
        %v816 = vld [vmem:[%s156 + $0xfe8] sm:$0xff]
        %v817 = vld [vmem:[%s156 + $0xff0] sm:$0xff]
        %v818 = vld [vmem:[%s156 + $0xff8] sm:$0xff]
        %819 = vmatprep.subr.mxu0 %v308
        %820 = vmatpush1.msra.mxu0 %v307
        %821 = vmatprep.subr.mxu0 %v312
        %822 = vmatpush1.msra.mxu0 %v311
        %823 = vmatprep.subr.mxu0 %v316
        %824 = vmatpush1.msra.mxu0 %v315
        %825 = vmatprep.subr.mxu0 %v320
        %826 = vmatpush1.msra.mxu0 %v319
        %827 = vmatprep.subr.mxu0 %v324
        %828 = vmatpush1.msra.mxu0 %v323
        %829 = vmatprep.subr.mxu0 %v328
        %830 = vmatpush1.msra.mxu0 %v327
        %831 = vmatprep.subr.mxu0 %v332
        %832 = vmatpush1.msra.mxu0 %v331
        %833 = vmatprep.subr.mxu0 %v336
        %834 = vmatpush1.msra.mxu0 %v335
        %835 = vmatprep.subr.mxu0 %v340
        %836 = vmatpush1.msra.mxu0 %v339
        %837 = vmatprep.subr.mxu0 %v344
        %838 = vmatpush1.msra.mxu0 %v343
        %839 = vmatprep.subr.mxu0 %v348
        %840 = vmatpush1.msra.mxu0 %v347
        %841 = vmatprep.subr.mxu0 %v352
        %842 = vmatpush1.msra.mxu0 %v351
        %843 = vmatprep.subr.mxu0 %v356
        %844 = vmatpush1.msra.mxu0 %v355
        %845 = vmatprep.subr.mxu0 %v360
        %846 = vmatpush1.msra.mxu0 %v359
        %847 = vmatprep.subr.mxu0 %v364
        %848 = vmatpush1.msra.mxu0 %v363
        %849 = vmatprep.subr.mxu0 %v368
        %850 = vmatpush1.msra.mxu0 %v367
        %851 = vmatprep.subr.mxu0 %v372
        %852 = vmatpush1.msra.mxu0 %v371
        %853 = vmatprep.subr.mxu0 %v376
        %854 = vmatpush1.msra.mxu0 %v375
        %855 = vmatprep.subr.mxu0 %v380
        %856 = vmatpush1.msra.mxu0 %v379
        %857 = vmatprep.subr.mxu0 %v384
        %858 = vmatpush1.msra.mxu0 %v383
        %859 = vmatprep.subr.mxu0 %v388
        %860 = vmatpush1.msra.mxu0 %v387
        %861 = vmatprep.subr.mxu0 %v392
        %862 = vmatpush1.msra.mxu0 %v391
        %863 = vmatprep.subr.mxu0 %v396
        %864 = vmatpush1.msra.mxu0 %v395
        %865 = vmatprep.subr.mxu0 %v400
        %866 = vmatpush1.msra.mxu0 %v399
        %867 = vmatprep.subr.mxu0 %v404
        %868 = vmatpush1.msra.mxu0 %v403
        %869 = vmatprep.subr.mxu0 %v408
        %870 = vmatpush1.msra.mxu0 %v407
        %871 = vmatprep.subr.mxu0 %v412
        %872 = vmatpush1.msra.mxu0 %v411
        %873 = vmatprep.subr.mxu0 %v416
        %874 = vmatpush1.msra.mxu0 %v415
        %875 = vmatprep.subr.mxu0 %v420
        %876 = vmatpush1.msra.mxu0 %v419
        %877 = vmatprep.subr.mxu0 %v424
        %878 = vmatpush1.msra.mxu0 %v423
        %879 = vmatprep.subr.mxu0 %v428
        %880 = vmatpush1.msra.mxu0 %v427
        %881 = vmatprep.subr.mxu0 %v432
        %882 = vmatpush1.msra.mxu0 %v431
        %883 = vmatprep.mubr.f32.mxu0 %v180
        %884 = vmatmul.mubr.f32.gmra.mrb[0].mxu0 %v179
        %v885 = vpop.f32.mrb[0].mxu0
        %v886 = vadd.f32 0.0, %v885
        %v887 = vpop.f32.mrb[0].mxu0
        %v888 = vadd.f32 0.0, %v887
        %889 = vmatprep.mubr.f32.mxu0 %v188
        %890 = vmatmul.mubr.f32.gmra.mrb[0].mxu0 %v187
        %v891 = vpop.f32.mrb[0].mxu0
        %v892 = vadd.f32 0.0, %v891
        %v893 = vpop.f32.mrb[0].mxu0
        %v894 = vadd.f32 0.0, %v893
        %895 = vmatprep.mubr.f32.mxu0 %v196
        %896 = vmatmul.mubr.f32.gmra.mrb[0].mxu0 %v195
        %v897 = vpop.f32.mrb[0].mxu0
        %v898 = vadd.f32 0.0, %v897
        %v899 = vpop.f32.mrb[0].mxu0
        %v900 = vadd.f32 0.0, %v899
        %901 = vmatprep.mubr.f32.mxu0 %v204
        %902 = vmatmul.mubr.f32.gmra.mrb[0].mxu0 %v203
        %v903 = vpop.f32.mrb[0].mxu0
        %v904 = vadd.f32 0.0, %v903
        %v905 = vpop.f32.mrb[0].mxu0
        %v906 = vadd.f32 0.0, %v905
        %907 = vmatprep.mubr.f32.mxu0 %v212
        %908 = vmatmul.mubr.f32.gmra.mrb[0].mxu0 %v211
        %v909 = vpop.f32.mrb[0].mxu0
        %v910 = vadd.f32 0.0, %v909
        %v911 = vpop.f32.mrb[0].mxu0
        %v912 = vadd.f32 0.0, %v911
        %913 = vmatprep.mubr.f32.mxu0 %v220
        %914 = vmatmul.mubr.f32.gmra.mrb[0].mxu0 %v219
        %v915 = vpop.f32.mrb[0].mxu0
        %v916 = vadd.f32 0.0, %v915
        %v917 = vpop.f32.mrb[0].mxu0
        %v918 = vadd.f32 0.0, %v917
        %919 = vmatprep.mubr.f32.mxu0 %v228
        %920 = vmatmul.mubr.f32.gmra.mrb[0].mxu0 %v227
        %v921 = vpop.f32.mrb[0].mxu0
        %v922 = vadd.f32 0.0, %v921
        %v923 = vpop.f32.mrb[0].mxu0
        %v924 = vadd.f32 0.0, %v923
        %925 = vmatprep.mubr.f32.mxu0 %v236
        %926 = vmatmul.mubr.f32.gmra.mrb[0].mxu0 %v235
        %v927 = vpop.f32.mrb[0].mxu0
        %v928 = vadd.f32 0.0, %v927
        %v929 = vpop.f32.mrb[0].mxu0
        %v930 = vadd.f32 0.0, %v929
        %931 = vmatprep.mubr.f32.mxu0 %v244
        %932 = vmatmul.mubr.f32.gmra.mrb[0].mxu0 %v243
        %v933 = vpop.f32.mrb[0].mxu0
        %v934 = vadd.f32 0.0, %v933
        %v935 = vpop.f32.mrb[0].mxu0
        %v936 = vadd.f32 0.0, %v935
        %937 = vmatprep.mubr.f32.mxu0 %v252
        %938 = vmatmul.mubr.f32.gmra.mrb[0].mxu0 %v251
        %v939 = vpop.f32.mrb[0].mxu0
        %v940 = vadd.f32 0.0, %v939
        %v941 = vpop.f32.mrb[0].mxu0
        %v942 = vadd.f32 0.0, %v941
        %943 = vmatprep.mubr.f32.mxu0 %v260
        %944 = vmatmul.mubr.f32.gmra.mrb[0].mxu0 %v259
        %v945 = vpop.f32.mrb[0].mxu0
        %v946 = vadd.f32 0.0, %v945
        %v947 = vpop.f32.mrb[0].mxu0
        %v948 = vadd.f32 0.0, %v947
        %949 = vmatprep.mubr.f32.mxu0 %v268
        %950 = vmatmul.mubr.f32.gmra.mrb[0].mxu0 %v267
        %v951 = vpop.f32.mrb[0].mxu0
        %v952 = vadd.f32 0.0, %v951
        %v953 = vpop.f32.mrb[0].mxu0
        %v954 = vadd.f32 0.0, %v953
        %955 = vmatprep.mubr.f32.mxu0 %v276
        %956 = vmatmul.mubr.f32.gmra.mrb[0].mxu0 %v275
        %v957 = vpop.f32.mrb[0].mxu0
        %v958 = vadd.f32 0.0, %v957
        %v959 = vpop.f32.mrb[0].mxu0
        %v960 = vadd.f32 0.0, %v959
        %961 = vmatprep.mubr.f32.mxu0 %v284
        %962 = vmatmul.mubr.f32.gmra.mrb[0].mxu0 %v283
        %v963 = vpop.f32.mrb[0].mxu0
        %v964 = vadd.f32 0.0, %v963
        %v965 = vpop.f32.mrb[0].mxu0
        %v966 = vadd.f32 0.0, %v965
        %967 = vmatprep.mubr.f32.mxu0 %v292
        %968 = vmatmul.mubr.f32.gmra.mrb[0].mxu0 %v291
        %v969 = vpop.f32.mrb[0].mxu0
        %v970 = vadd.f32 0.0, %v969
        %v971 = vpop.f32.mrb[0].mxu0
        %v972 = vadd.f32 0.0, %v971
        %973 = vmatprep.mubr.f32.mxu0 %v300
        %974 = vmatmul.mubr.f32.gmra.mrb[0].mxu0 %v299
        %v975 = vpop.f32.mrb[0].mxu0
        %v976 = vadd.f32 0.0, %v975
        %v977 = vpop.f32.mrb[0].mxu0
        %v978 = vadd.f32 0.0, %v977
        %979 = vdwg.mxu0
        %980 = vmatprep.subr.mxu0 %v436
        %981 = vmatpush1.msra.mxu0 %v435
        %982 = vmatprep.subr.mxu0 %v440
        %983 = vmatpush1.msra.mxu0 %v439
        %984 = vmatprep.subr.mxu0 %v444
        %985 = vmatpush1.msra.mxu0 %v443
        %986 = vmatprep.subr.mxu0 %v448
        %987 = vmatpush1.msra.mxu0 %v447
        %988 = vmatprep.subr.mxu0 %v452
        %989 = vmatpush1.msra.mxu0 %v451
        %990 = vmatprep.subr.mxu0 %v456
        %991 = vmatpush1.msra.mxu0 %v455
        %992 = vmatprep.subr.mxu0 %v460
        %993 = vmatpush1.msra.mxu0 %v459
        %994 = vmatprep.subr.mxu0 %v464
        %995 = vmatpush1.msra.mxu0 %v463
        %996 = vmatprep.subr.mxu0 %v468
        %997 = vmatpush1.msra.mxu0 %v467
        %998 = vmatprep.subr.mxu0 %v472
        %999 = vmatpush1.msra.mxu0 %v471
        %1000 = vmatprep.subr.mxu0 %v476
        %1001 = vmatpush1.msra.mxu0 %v475
        %1002 = vmatprep.subr.mxu0 %v480
        %1003 = vmatpush1.msra.mxu0 %v479
        %1004 = vmatprep.subr.mxu0 %v484
        %1005 = vmatpush1.msra.mxu0 %v483
        %1006 = vmatprep.subr.mxu0 %v488
        %1007 = vmatpush1.msra.mxu0 %v487
        %1008 = vmatprep.subr.mxu0 %v492
        %1009 = vmatpush1.msra.mxu0 %v491
        %1010 = vmatprep.subr.mxu0 %v496
        %1011 = vmatpush1.msra.mxu0 %v495
        %1012 = vmatprep.subr.mxu0 %v500
        %1013 = vmatpush1.msra.mxu0 %v499
        %1014 = vmatprep.subr.mxu0 %v504
        %1015 = vmatpush1.msra.mxu0 %v503
        %1016 = vmatprep.subr.mxu0 %v508
        %1017 = vmatpush1.msra.mxu0 %v507
        %1018 = vmatprep.subr.mxu0 %v512
        %1019 = vmatpush1.msra.mxu0 %v511
        %1020 = vmatprep.subr.mxu0 %v516
        %1021 = vmatpush1.msra.mxu0 %v515
        %1022 = vmatprep.subr.mxu0 %v520
        %1023 = vmatpush1.msra.mxu0 %v519
        %1024 = vmatprep.subr.mxu0 %v524
        %1025 = vmatpush1.msra.mxu0 %v523
        %1026 = vmatprep.subr.mxu0 %v528
        %1027 = vmatpush1.msra.mxu0 %v527
        %1028 = vmatprep.subr.mxu0 %v532
        %1029 = vmatpush1.msra.mxu0 %v531
        %1030 = vmatprep.subr.mxu0 %v536
        %1031 = vmatpush1.msra.mxu0 %v535
        %1032 = vmatprep.subr.mxu0 %v540
        %1033 = vmatpush1.msra.mxu0 %v539
        %1034 = vmatprep.subr.mxu0 %v544
        %1035 = vmatpush1.msra.mxu0 %v543
        %1036 = vmatprep.subr.mxu0 %v548
        %1037 = vmatpush1.msra.mxu0 %v547
        %1038 = vmatprep.subr.mxu0 %v552
        %1039 = vmatpush1.msra.mxu0 %v551
        %1040 = vmatprep.subr.mxu0 %v556
        %1041 = vmatpush1.msra.mxu0 %v555
        %1042 = vmatprep.subr.mxu0 %v560
        %1043 = vmatpush1.msra.mxu0 %v559
        %1044 = vmatprep.mubr.f32.mxu0 %v182
        %1045 = vmatmul.mubr.f32.gmra.mrb[0].mxu0 %v181
        %v1046 = vpop.f32.mrb[0].mxu0
        %v1047 = vadd.f32 %v886, %v1046
        %v1048 = vpop.f32.mrb[0].mxu0
        %v1049 = vadd.f32 %v888, %v1048
        %1050 = vmatprep.mubr.f32.mxu0 %v190
        %1051 = vmatmul.mubr.f32.gmra.mrb[0].mxu0 %v189
        %v1052 = vpop.f32.mrb[0].mxu0
        %v1053 = vadd.f32 %v892, %v1052
        %v1054 = vpop.f32.mrb[0].mxu0
        %v1055 = vadd.f32 %v894, %v1054
        %1056 = vmatprep.mubr.f32.mxu0 %v198
        %1057 = vmatmul.mubr.f32.gmra.mrb[0].mxu0 %v197
        %v1058 = vpop.f32.mrb[0].mxu0
        %v1059 = vadd.f32 %v898, %v1058
        %v1060 = vpop.f32.mrb[0].mxu0
        %v1061 = vadd.f32 %v900, %v1060
        %1062 = vmatprep.mubr.f32.mxu0 %v206
        %1063 = vmatmul.mubr.f32.gmra.mrb[0].mxu0 %v205
        %v1064 = vpop.f32.mrb[0].mxu0
        %v1065 = vadd.f32 %v904, %v1064
        %v1066 = vpop.f32.mrb[0].mxu0
        %v1067 = vadd.f32 %v906, %v1066
        %1068 = vmatprep.mubr.f32.mxu0 %v214
        %1069 = vmatmul.mubr.f32.gmra.mrb[0].mxu0 %v213
        %v1070 = vpop.f32.mrb[0].mxu0
        %v1071 = vadd.f32 %v910, %v1070
        %v1072 = vpop.f32.mrb[0].mxu0
        %v1073 = vadd.f32 %v912, %v1072
        %1074 = vmatprep.mubr.f32.mxu0 %v222
        %1075 = vmatmul.mubr.f32.gmra.mrb[0].mxu0 %v221
        %v1076 = vpop.f32.mrb[0].mxu0
        %v1077 = vadd.f32 %v916, %v1076
        %v1078 = vpop.f32.mrb[0].mxu0
        %v1079 = vadd.f32 %v918, %v1078
        %1080 = vmatprep.mubr.f32.mxu0 %v230
        %1081 = vmatmul.mubr.f32.gmra.mrb[0].mxu0 %v229
        %v1082 = vpop.f32.mrb[0].mxu0
        %v1083 = vadd.f32 %v922, %v1082
        %v1084 = vpop.f32.mrb[0].mxu0
        %v1085 = vadd.f32 %v924, %v1084
        %1086 = vmatprep.mubr.f32.mxu0 %v238
        %1087 = vmatmul.mubr.f32.gmra.mrb[0].mxu0 %v237
        %v1088 = vpop.f32.mrb[0].mxu0
        %v1089 = vadd.f32 %v928, %v1088
        %v1090 = vpop.f32.mrb[0].mxu0
        %v1091 = vadd.f32 %v930, %v1090
        %1092 = vmatprep.mubr.f32.mxu0 %v246
        %1093 = vmatmul.mubr.f32.gmra.mrb[0].mxu0 %v245
        %v1094 = vpop.f32.mrb[0].mxu0
        %v1095 = vadd.f32 %v934, %v1094
        %v1096 = vpop.f32.mrb[0].mxu0
        %v1097 = vadd.f32 %v936, %v1096
        %1098 = vmatprep.mubr.f32.mxu0 %v254
        %1099 = vmatmul.mubr.f32.gmra.mrb[0].mxu0 %v253
        %v1100 = vpop.f32.mrb[0].mxu0
        %v1101 = vadd.f32 %v940, %v1100
        %v1102 = vpop.f32.mrb[0].mxu0
        %v1103 = vadd.f32 %v942, %v1102
        %1104 = vmatprep.mubr.f32.mxu0 %v262
        %1105 = vmatmul.mubr.f32.gmra.mrb[0].mxu0 %v261
        %v1106 = vpop.f32.mrb[0].mxu0
        %v1107 = vadd.f32 %v946, %v1106
        %v1108 = vpop.f32.mrb[0].mxu0
        %v1109 = vadd.f32 %v948, %v1108
        %1110 = vmatprep.mubr.f32.mxu0 %v270
        %1111 = vmatmul.mubr.f32.gmra.mrb[0].mxu0 %v269
        %v1112 = vpop.f32.mrb[0].mxu0
        %v1113 = vadd.f32 %v952, %v1112
        %v1114 = vpop.f32.mrb[0].mxu0
        %v1115 = vadd.f32 %v954, %v1114
        %1116 = vmatprep.mubr.f32.mxu0 %v278
        %1117 = vmatmul.mubr.f32.gmra.mrb[0].mxu0 %v277
        %v1118 = vpop.f32.mrb[0].mxu0
        %v1119 = vadd.f32 %v958, %v1118
        %v1120 = vpop.f32.mrb[0].mxu0
        %v1121 = vadd.f32 %v960, %v1120
        %1122 = vmatprep.mubr.f32.mxu0 %v286
        %1123 = vmatmul.mubr.f32.gmra.mrb[0].mxu0 %v285
        %v1124 = vpop.f32.mrb[0].mxu0
        %v1125 = vadd.f32 %v964, %v1124
        %v1126 = vpop.f32.mrb[0].mxu0
        %v1127 = vadd.f32 %v966, %v1126
        %1128 = vmatprep.mubr.f32.mxu0 %v294
        %1129 = vmatmul.mubr.f32.gmra.mrb[0].mxu0 %v293
        %v1130 = vpop.f32.mrb[0].mxu0
        %v1131 = vadd.f32 %v970, %v1130
        %v1132 = vpop.f32.mrb[0].mxu0
        %v1133 = vadd.f32 %v972, %v1132
        %1134 = vmatprep.mubr.f32.mxu0 %v302
        %1135 = vmatmul.mubr.f32.gmra.mrb[0].mxu0 %v301
        %v1136 = vpop.f32.mrb[0].mxu0
        %v1137 = vadd.f32 %v976, %v1136
        %v1138 = vpop.f32.mrb[0].mxu0
        %v1139 = vadd.f32 %v978, %v1138
        %1140 = vdwg.mxu0
        %1141 = vmatprep.subr.mxu0 %v564
        %1142 = vmatpush1.msra.mxu0 %v563
        %1143 = vmatprep.subr.mxu0 %v568
        %1144 = vmatpush1.msra.mxu0 %v567
        %1145 = vmatprep.subr.mxu0 %v572
        %1146 = vmatpush1.msra.mxu0 %v571
        %1147 = vmatprep.subr.mxu0 %v576
        %1148 = vmatpush1.msra.mxu0 %v575
        %1149 = vmatprep.subr.mxu0 %v580
        %1150 = vmatpush1.msra.mxu0 %v579
        %1151 = vmatprep.subr.mxu0 %v584
        %1152 = vmatpush1.msra.mxu0 %v583
        %1153 = vmatprep.subr.mxu0 %v588
        %1154 = vmatpush1.msra.mxu0 %v587
        %1155 = vmatprep.subr.mxu0 %v592
        %1156 = vmatpush1.msra.mxu0 %v591
        %1157 = vmatprep.subr.mxu0 %v596
        %1158 = vmatpush1.msra.mxu0 %v595
        %1159 = vmatprep.subr.mxu0 %v600
        %1160 = vmatpush1.msra.mxu0 %v599
        %1161 = vmatprep.subr.mxu0 %v604
        %1162 = vmatpush1.msra.mxu0 %v603
        %1163 = vmatprep.subr.mxu0 %v608
        %1164 = vmatpush1.msra.mxu0 %v607
        %1165 = vmatprep.subr.mxu0 %v612
        %1166 = vmatpush1.msra.mxu0 %v611
        %1167 = vmatprep.subr.mxu0 %v616
        %1168 = vmatpush1.msra.mxu0 %v615
        %1169 = vmatprep.subr.mxu0 %v620
        %1170 = vmatpush1.msra.mxu0 %v619
        %1171 = vmatprep.subr.mxu0 %v624
        %1172 = vmatpush1.msra.mxu0 %v623
        %1173 = vmatprep.subr.mxu0 %v628
        %1174 = vmatpush1.msra.mxu0 %v627
        %1175 = vmatprep.subr.mxu0 %v632
        %1176 = vmatpush1.msra.mxu0 %v631
        %1177 = vmatprep.subr.mxu0 %v636
        %1178 = vmatpush1.msra.mxu0 %v635
        %1179 = vmatprep.subr.mxu0 %v640
        %1180 = vmatpush1.msra.mxu0 %v639
        %1181 = vmatprep.subr.mxu0 %v644
        %1182 = vmatpush1.msra.mxu0 %v643
        %1183 = vmatprep.subr.mxu0 %v648
        %1184 = vmatpush1.msra.mxu0 %v647
        %1185 = vmatprep.subr.mxu0 %v652
        %1186 = vmatpush1.msra.mxu0 %v651
        %1187 = vmatprep.subr.mxu0 %v656
        %1188 = vmatpush1.msra.mxu0 %v655
        %1189 = vmatprep.subr.mxu0 %v660
        %1190 = vmatpush1.msra.mxu0 %v659
        %1191 = vmatprep.subr.mxu0 %v664
        %1192 = vmatpush1.msra.mxu0 %v663
        %1193 = vmatprep.subr.mxu0 %v668
        %1194 = vmatpush1.msra.mxu0 %v667
        %1195 = vmatprep.subr.mxu0 %v672
        %1196 = vmatpush1.msra.mxu0 %v671
        %1197 = vmatprep.subr.mxu0 %v676
        %1198 = vmatpush1.msra.mxu0 %v675
        %1199 = vmatprep.subr.mxu0 %v680
        %1200 = vmatpush1.msra.mxu0 %v679
        %1201 = vmatprep.subr.mxu0 %v684
        %1202 = vmatpush1.msra.mxu0 %v683
        %1203 = vmatprep.subr.mxu0 %v688
        %1204 = vmatpush1.msra.mxu0 %v687
        %1205 = vmatprep.mubr.f32.mxu0 %v184
        %1206 = vmatmul.mubr.f32.gmra.mrb[0].mxu0 %v183
        %v1207 = vpop.f32.mrb[0].mxu0
        %v1208 = vadd.f32 %v1047, %v1207
        %v1209 = vpop.f32.mrb[0].mxu0
        %v1210 = vadd.f32 %v1049, %v1209
        %1211 = vmatprep.mubr.f32.mxu0 %v192
        %1212 = vmatmul.mubr.f32.gmra.mrb[0].mxu0 %v191
        %v1213 = vpop.f32.mrb[0].mxu0
        %v1214 = vadd.f32 %v1053, %v1213
        %v1215 = vpop.f32.mrb[0].mxu0
        %v1216 = vadd.f32 %v1055, %v1215
        %1217 = vmatprep.mubr.f32.mxu0 %v200
        %1218 = vmatmul.mubr.f32.gmra.mrb[0].mxu0 %v199
        %v1219 = vpop.f32.mrb[0].mxu0
        %v1220 = vadd.f32 %v1059, %v1219
        %v1221 = vpop.f32.mrb[0].mxu0
        %v1222 = vadd.f32 %v1061, %v1221
        %1223 = vmatprep.mubr.f32.mxu0 %v208
        %1224 = vmatmul.mubr.f32.gmra.mrb[0].mxu0 %v207
        %v1225 = vpop.f32.mrb[0].mxu0
        %v1226 = vadd.f32 %v1065, %v1225
        %v1227 = vpop.f32.mrb[0].mxu0
        %v1228 = vadd.f32 %v1067, %v1227
        %1229 = vmatprep.mubr.f32.mxu0 %v216
        %1230 = vmatmul.mubr.f32.gmra.mrb[0].mxu0 %v215
        %v1231 = vpop.f32.mrb[0].mxu0
        %v1232 = vadd.f32 %v1071, %v1231
        %v1233 = vpop.f32.mrb[0].mxu0
        %v1234 = vadd.f32 %v1073, %v1233
        %1235 = vmatprep.mubr.f32.mxu0 %v224
        %1236 = vmatmul.mubr.f32.gmra.mrb[0].mxu0 %v223
        %v1237 = vpop.f32.mrb[0].mxu0
        %v1238 = vadd.f32 %v1077, %v1237
        %v1239 = vpop.f32.mrb[0].mxu0
        %v1240 = vadd.f32 %v1079, %v1239
        %1241 = vmatprep.mubr.f32.mxu0 %v232
        %1242 = vmatmul.mubr.f32.gmra.mrb[0].mxu0 %v231
        %v1243 = vpop.f32.mrb[0].mxu0
        %v1244 = vadd.f32 %v1083, %v1243
        %v1245 = vpop.f32.mrb[0].mxu0
        %v1246 = vadd.f32 %v1085, %v1245
        %1247 = vmatprep.mubr.f32.mxu0 %v240
        %1248 = vmatmul.mubr.f32.gmra.mrb[0].mxu0 %v239
        %v1249 = vpop.f32.mrb[0].mxu0
        %v1250 = vadd.f32 %v1089, %v1249
        %v1251 = vpop.f32.mrb[0].mxu0
        %v1252 = vadd.f32 %v1091, %v1251
        %1253 = vmatprep.mubr.f32.mxu0 %v248
        %1254 = vmatmul.mubr.f32.gmra.mrb[0].mxu0 %v247
        %v1255 = vpop.f32.mrb[0].mxu0
        %v1256 = vadd.f32 %v1095, %v1255
        %v1257 = vpop.f32.mrb[0].mxu0
        %v1258 = vadd.f32 %v1097, %v1257
        %1259 = vmatprep.mubr.f32.mxu0 %v256
        %1260 = vmatmul.mubr.f32.gmra.mrb[0].mxu0 %v255
        %v1261 = vpop.f32.mrb[0].mxu0
        %v1262 = vadd.f32 %v1101, %v1261
        %v1263 = vpop.f32.mrb[0].mxu0
        %v1264 = vadd.f32 %v1103, %v1263
        %1265 = vmatprep.mubr.f32.mxu0 %v264
        %1266 = vmatmul.mubr.f32.gmra.mrb[0].mxu0 %v263
        %v1267 = vpop.f32.mrb[0].mxu0
        %v1268 = vadd.f32 %v1107, %v1267
        %v1269 = vpop.f32.mrb[0].mxu0
        %v1270 = vadd.f32 %v1109, %v1269
        %1271 = vmatprep.mubr.f32.mxu0 %v272
        %1272 = vmatmul.mubr.f32.gmra.mrb[0].mxu0 %v271
        %v1273 = vpop.f32.mrb[0].mxu0
        %v1274 = vadd.f32 %v1113, %v1273
        %v1275 = vpop.f32.mrb[0].mxu0
        %v1276 = vadd.f32 %v1115, %v1275
        %1277 = vmatprep.mubr.f32.mxu0 %v280
        %1278 = vmatmul.mubr.f32.gmra.mrb[0].mxu0 %v279
        %v1279 = vpop.f32.mrb[0].mxu0
        %v1280 = vadd.f32 %v1119, %v1279
        %v1281 = vpop.f32.mrb[0].mxu0
        %v1282 = vadd.f32 %v1121, %v1281
        %1283 = vmatprep.mubr.f32.mxu0 %v288
        %1284 = vmatmul.mubr.f32.gmra.mrb[0].mxu0 %v287
        %v1285 = vpop.f32.mrb[0].mxu0
        %v1286 = vadd.f32 %v1125, %v1285
        %v1287 = vpop.f32.mrb[0].mxu0
        %v1288 = vadd.f32 %v1127, %v1287
        %1289 = vmatprep.mubr.f32.mxu0 %v296
        %1290 = vmatmul.mubr.f32.gmra.mrb[0].mxu0 %v295
        %v1291 = vpop.f32.mrb[0].mxu0
        %v1292 = vadd.f32 %v1131, %v1291
        %v1293 = vpop.f32.mrb[0].mxu0
        %v1294 = vadd.f32 %v1133, %v1293
        %1295 = vmatprep.mubr.f32.mxu0 %v304
        %1296 = vmatmul.mubr.f32.gmra.mrb[0].mxu0 %v303
        %v1297 = vpop.f32.mrb[0].mxu0
        %v1298 = vadd.f32 %v1137, %v1297
        %v1299 = vpop.f32.mrb[0].mxu0
        %v1300 = vadd.f32 %v1139, %v1299
        %1301 = vdwg.mxu0
        %1302 = vmatprep.subr.mxu0 %v692
        %1303 = vmatpush1.msra.mxu0 %v691
        %1304 = vmatprep.subr.mxu0 %v696
        %1305 = vmatpush1.msra.mxu0 %v695
        %1306 = vmatprep.subr.mxu0 %v700
        %1307 = vmatpush1.msra.mxu0 %v699
        %1308 = vmatprep.subr.mxu0 %v704
        %1309 = vmatpush1.msra.mxu0 %v703
        %1310 = vmatprep.subr.mxu0 %v708
        %1311 = vmatpush1.msra.mxu0 %v707
        %1312 = vmatprep.subr.mxu0 %v712
        %1313 = vmatpush1.msra.mxu0 %v711
        %1314 = vmatprep.subr.mxu0 %v716
        %1315 = vmatpush1.msra.mxu0 %v715
        %1316 = vmatprep.subr.mxu0 %v720
        %1317 = vmatpush1.msra.mxu0 %v719
        %1318 = vmatprep.subr.mxu0 %v724
        %1319 = vmatpush1.msra.mxu0 %v723
        %1320 = vmatprep.subr.mxu0 %v728
        %1321 = vmatpush1.msra.mxu0 %v727
        %1322 = vmatprep.subr.mxu0 %v732
        %1323 = vmatpush1.msra.mxu0 %v731
        %1324 = vmatprep.subr.mxu0 %v736
        %1325 = vmatpush1.msra.mxu0 %v735
        %1326 = vmatprep.subr.mxu0 %v740
        %1327 = vmatpush1.msra.mxu0 %v739
        %1328 = vmatprep.subr.mxu0 %v744
        %1329 = vmatpush1.msra.mxu0 %v743
        %1330 = vmatprep.subr.mxu0 %v748
        %1331 = vmatpush1.msra.mxu0 %v747
        %1332 = vmatprep.subr.mxu0 %v752
        %1333 = vmatpush1.msra.mxu0 %v751
        %1334 = vmatprep.subr.mxu0 %v756
        %1335 = vmatpush1.msra.mxu0 %v755
        %1336 = vmatprep.subr.mxu0 %v760
        %1337 = vmatpush1.msra.mxu0 %v759
        %1338 = vmatprep.subr.mxu0 %v764
        %1339 = vmatpush1.msra.mxu0 %v763
        %1340 = vmatprep.subr.mxu0 %v768
        %1341 = vmatpush1.msra.mxu0 %v767
        %1342 = vmatprep.subr.mxu0 %v772
        %1343 = vmatpush1.msra.mxu0 %v771
        %1344 = vmatprep.subr.mxu0 %v776
        %1345 = vmatpush1.msra.mxu0 %v775
        %1346 = vmatprep.subr.mxu0 %v780
        %1347 = vmatpush1.msra.mxu0 %v779
        %1348 = vmatprep.subr.mxu0 %v784
        %1349 = vmatpush1.msra.mxu0 %v783
        %1350 = vmatprep.subr.mxu0 %v788
        %1351 = vmatpush1.msra.mxu0 %v787
        %1352 = vmatprep.subr.mxu0 %v792
        %1353 = vmatpush1.msra.mxu0 %v791
        %1354 = vmatprep.subr.mxu0 %v796
        %1355 = vmatpush1.msra.mxu0 %v795
        %1356 = vmatprep.subr.mxu0 %v800
        %1357 = vmatpush1.msra.mxu0 %v799
        %1358 = vmatprep.subr.mxu0 %v804
        %1359 = vmatpush1.msra.mxu0 %v803
        %1360 = vmatprep.subr.mxu0 %v808
        %1361 = vmatpush1.msra.mxu0 %v807
        %1362 = vmatprep.subr.mxu0 %v812
        %1363 = vmatpush1.msra.mxu0 %v811
        %1364 = vmatprep.subr.mxu0 %v816
        %1365 = vmatpush1.msra.mxu0 %v815
        %1366 = vmatprep.mubr.f32.mxu0 %v186
        %1367 = vmatmul.mubr.f32.gmra.mrb[0].mxu0 %v185
        %v1368 = vpop.f32.mrb[0].mxu0
        %v1369 = vadd.f32 %v1208, %v1368
        %v1370 = vpop.f32.mrb[0].mxu0
        %v1371 = vadd.f32 %v1210, %v1370
        %1372 = vmatprep.mubr.f32.mxu0 %v194
        %1373 = vmatmul.mubr.f32.gmra.mrb[0].mxu0 %v193
        %v1374 = vpop.f32.mrb[0].mxu0
        %v1375 = vadd.f32 %v1214, %v1374
        %v1376 = vpop.f32.mrb[0].mxu0
        %v1377 = vadd.f32 %v1216, %v1376
        %1378 = vmatprep.mubr.f32.mxu0 %v202
        %1379 = vmatmul.mubr.f32.gmra.mrb[0].mxu0 %v201
        %v1380 = vpop.f32.mrb[0].mxu0
        %v1381 = vadd.f32 %v1220, %v1380
        %v1382 = vpop.f32.mrb[0].mxu0
        %v1383 = vadd.f32 %v1222, %v1382
        %1384 = vmatprep.mubr.f32.mxu0 %v210
        %1385 = vmatmul.mubr.f32.gmra.mrb[0].mxu0 %v209
        %v1386 = vpop.f32.mrb[0].mxu0
        %v1387 = vadd.f32 %v1226, %v1386
        %v1388 = vpop.f32.mrb[0].mxu0
        %v1389 = vadd.f32 %v1228, %v1388
        %1390 = vmatprep.mubr.f32.mxu0 %v218
        %1391 = vmatmul.mubr.f32.gmra.mrb[0].mxu0 %v217
        %v1392 = vpop.f32.mrb[0].mxu0
        %v1393 = vadd.f32 %v1232, %v1392
        %v1394 = vpop.f32.mrb[0].mxu0
        %v1395 = vadd.f32 %v1234, %v1394
        %1396 = vmatprep.mubr.f32.mxu0 %v226
        %1397 = vmatmul.mubr.f32.gmra.mrb[0].mxu0 %v225
        %v1398 = vpop.f32.mrb[0].mxu0
        %v1399 = vadd.f32 %v1238, %v1398
        %v1400 = vpop.f32.mrb[0].mxu0
        %v1401 = vadd.f32 %v1240, %v1400
        %1402 = vmatprep.mubr.f32.mxu0 %v234
        %1403 = vmatmul.mubr.f32.gmra.mrb[0].mxu0 %v233
        %v1404 = vpop.f32.mrb[0].mxu0
        %v1405 = vadd.f32 %v1244, %v1404
        %v1406 = vpop.f32.mrb[0].mxu0
        %v1407 = vadd.f32 %v1246, %v1406
        %1408 = vmatprep.mubr.f32.mxu0 %v242
        %1409 = vmatmul.mubr.f32.gmra.mrb[0].mxu0 %v241
        %v1410 = vpop.f32.mrb[0].mxu0
        %v1411 = vadd.f32 %v1250, %v1410
        %v1412 = vpop.f32.mrb[0].mxu0
        %v1413 = vadd.f32 %v1252, %v1412
        %1414 = vmatprep.mubr.f32.mxu0 %v250
        %1415 = vmatmul.mubr.f32.gmra.mrb[0].mxu0 %v249
        %v1416 = vpop.f32.mrb[0].mxu0
        %v1417 = vadd.f32 %v1256, %v1416
        %v1418 = vpop.f32.mrb[0].mxu0
        %v1419 = vadd.f32 %v1258, %v1418
        %1420 = vmatprep.mubr.f32.mxu0 %v258
        %1421 = vmatmul.mubr.f32.gmra.mrb[0].mxu0 %v257
        %v1422 = vpop.f32.mrb[0].mxu0
        %v1423 = vadd.f32 %v1262, %v1422
        %v1424 = vpop.f32.mrb[0].mxu0
        %v1425 = vadd.f32 %v1264, %v1424
        %1426 = vmatprep.mubr.f32.mxu0 %v266
        %1427 = vmatmul.mubr.f32.gmra.mrb[0].mxu0 %v265
        %v1428 = vpop.f32.mrb[0].mxu0
        %v1429 = vadd.f32 %v1268, %v1428
        %v1430 = vpop.f32.mrb[0].mxu0
        %v1431 = vadd.f32 %v1270, %v1430
        %1432 = vmatprep.mubr.f32.mxu0 %v274
        %1433 = vmatmul.mubr.f32.gmra.mrb[0].mxu0 %v273
        %v1434 = vpop.f32.mrb[0].mxu0
        %v1435 = vadd.f32 %v1274, %v1434
        %v1436 = vpop.f32.mrb[0].mxu0
        %v1437 = vadd.f32 %v1276, %v1436
        %1438 = vmatprep.mubr.f32.mxu0 %v282
        %1439 = vmatmul.mubr.f32.gmra.mrb[0].mxu0 %v281
        %v1440 = vpop.f32.mrb[0].mxu0
        %v1441 = vadd.f32 %v1280, %v1440
        %v1442 = vpop.f32.mrb[0].mxu0
        %v1443 = vadd.f32 %v1282, %v1442
        %1444 = vmatprep.mubr.f32.mxu0 %v290
        %1445 = vmatmul.mubr.f32.gmra.mrb[0].mxu0 %v289
        %v1446 = vpop.f32.mrb[0].mxu0
        %v1447 = vadd.f32 %v1286, %v1446
        %v1448 = vpop.f32.mrb[0].mxu0
        %v1449 = vadd.f32 %v1288, %v1448
        %1450 = vmatprep.mubr.f32.mxu0 %v298
        %1451 = vmatmul.mubr.f32.gmra.mrb[0].mxu0 %v297
        %v1452 = vpop.f32.mrb[0].mxu0
        %v1453 = vadd.f32 %v1292, %v1452
        %v1454 = vpop.f32.mrb[0].mxu0
        %v1455 = vadd.f32 %v1294, %v1454
        %1456 = vmatprep.mubr.f32.mxu0 %v306
        %1457 = vmatmul.mubr.f32.gmra.mrb[0].mxu0 %v305
        %v1458 = vpop.f32.mrb[0].mxu0
        %v1459 = vadd.f32 %v1298, %v1458
        %v1460 = vpop.f32.mrb[0].mxu0
        %v1461 = vadd.f32 %v1300, %v1460
        %1462 = vdwg.mxu0
        %1463 = vmatprep.subr.mxu0 %v310
        %1464 = vmatpush1.msra.mxu0 %v309
        %1465 = vmatprep.subr.mxu0 %v314
        %1466 = vmatpush1.msra.mxu0 %v313
        %1467 = vmatprep.subr.mxu0 %v318
        %1468 = vmatpush1.msra.mxu0 %v317
        %1469 = vmatprep.subr.mxu0 %v322
        %1470 = vmatpush1.msra.mxu0 %v321
        %1471 = vmatprep.subr.mxu0 %v326
        %1472 = vmatpush1.msra.mxu0 %v325
        %1473 = vmatprep.subr.mxu0 %v330
        %1474 = vmatpush1.msra.mxu0 %v329
        %1475 = vmatprep.subr.mxu0 %v334
        %1476 = vmatpush1.msra.mxu0 %v333
        %1477 = vmatprep.subr.mxu0 %v338
        %1478 = vmatpush1.msra.mxu0 %v337
        %1479 = vmatprep.subr.mxu0 %v342
        %1480 = vmatpush1.msra.mxu0 %v341
        %1481 = vmatprep.subr.mxu0 %v346
        %1482 = vmatpush1.msra.mxu0 %v345
        %1483 = vmatprep.subr.mxu0 %v350
        %1484 = vmatpush1.msra.mxu0 %v349
        %1485 = vmatprep.subr.mxu0 %v354
        %1486 = vmatpush1.msra.mxu0 %v353
        %1487 = vmatprep.subr.mxu0 %v358
        %1488 = vmatpush1.msra.mxu0 %v357
        %1489 = vmatprep.subr.mxu0 %v362
        %1490 = vmatpush1.msra.mxu0 %v361
        %1491 = vmatprep.subr.mxu0 %v366
        %1492 = vmatpush1.msra.mxu0 %v365
        %1493 = vmatprep.subr.mxu0 %v370
        %1494 = vmatpush1.msra.mxu0 %v369
        %1495 = vmatprep.subr.mxu0 %v374
        %1496 = vmatpush1.msra.mxu0 %v373
        %1497 = vmatprep.subr.mxu0 %v378
        %1498 = vmatpush1.msra.mxu0 %v377
        %1499 = vmatprep.subr.mxu0 %v382
        %1500 = vmatpush1.msra.mxu0 %v381
        %1501 = vmatprep.subr.mxu0 %v386
        %1502 = vmatpush1.msra.mxu0 %v385
        %1503 = vmatprep.subr.mxu0 %v390
        %1504 = vmatpush1.msra.mxu0 %v389
        %1505 = vmatprep.subr.mxu0 %v394
        %1506 = vmatpush1.msra.mxu0 %v393
        %1507 = vmatprep.subr.mxu0 %v398
        %1508 = vmatpush1.msra.mxu0 %v397
        %1509 = vmatprep.subr.mxu0 %v402
        %1510 = vmatpush1.msra.mxu0 %v401
        %1511 = vmatprep.subr.mxu0 %v406
        %1512 = vmatpush1.msra.mxu0 %v405
        %1513 = vmatprep.subr.mxu0 %v410
        %1514 = vmatpush1.msra.mxu0 %v409
        %1515 = vmatprep.subr.mxu0 %v414
        %1516 = vmatpush1.msra.mxu0 %v413
        %1517 = vmatprep.subr.mxu0 %v418
        %1518 = vmatpush1.msra.mxu0 %v417
        %1519 = vmatprep.subr.mxu0 %v422
        %1520 = vmatpush1.msra.mxu0 %v421
        %1521 = vmatprep.subr.mxu0 %v426
        %1522 = vmatpush1.msra.mxu0 %v425
        %1523 = vmatprep.subr.mxu0 %v430
        %1524 = vmatpush1.msra.mxu0 %v429
        %1525 = vmatprep.subr.mxu0 %v434
        %1526 = vmatpush1.msra.mxu0 %v433
        %1527 = vmatprep.mubr.f32.mxu0 %v180
        %1528 = vmatmul.mubr.f32.gmra.mrb[0].mxu0 %v179
        %v1529 = vpop.f32.mrb[0].mxu0
        %v1530 = vadd.f32 0.0, %v1529
        %v1531 = vpop.f32.mrb[0].mxu0
        %v1532 = vadd.f32 0.0, %v1531
        %1533 = vmatprep.mubr.f32.mxu0 %v188
        %1534 = vmatmul.mubr.f32.gmra.mrb[0].mxu0 %v187
        %v1535 = vpop.f32.mrb[0].mxu0
        %v1536 = vadd.f32 0.0, %v1535
        %v1537 = vpop.f32.mrb[0].mxu0
        %v1538 = vadd.f32 0.0, %v1537
        %1539 = vmatprep.mubr.f32.mxu0 %v196
        %1540 = vmatmul.mubr.f32.gmra.mrb[0].mxu0 %v195
        %v1541 = vpop.f32.mrb[0].mxu0
        %v1542 = vadd.f32 0.0, %v1541
        %v1543 = vpop.f32.mrb[0].mxu0
        %v1544 = vadd.f32 0.0, %v1543
        %1545 = vmatprep.mubr.f32.mxu0 %v204
        %1546 = vmatmul.mubr.f32.gmra.mrb[0].mxu0 %v203
        %v1547 = vpop.f32.mrb[0].mxu0
        %v1548 = vadd.f32 0.0, %v1547
        %v1549 = vpop.f32.mrb[0].mxu0
        %v1550 = vadd.f32 0.0, %v1549
        %1551 = vmatprep.mubr.f32.mxu0 %v212
        %1552 = vmatmul.mubr.f32.gmra.mrb[0].mxu0 %v211
        %v1553 = vpop.f32.mrb[0].mxu0
        %v1554 = vadd.f32 0.0, %v1553
        %v1555 = vpop.f32.mrb[0].mxu0
        %v1556 = vadd.f32 0.0, %v1555
        %1557 = vmatprep.mubr.f32.mxu0 %v220
        %1558 = vmatmul.mubr.f32.gmra.mrb[0].mxu0 %v219
        %v1559 = vpop.f32.mrb[0].mxu0
        %v1560 = vadd.f32 0.0, %v1559
        %v1561 = vpop.f32.mrb[0].mxu0
        %v1562 = vadd.f32 0.0, %v1561
        %1563 = vmatprep.mubr.f32.mxu0 %v228
        %1564 = vmatmul.mubr.f32.gmra.mrb[0].mxu0 %v227
        %v1565 = vpop.f32.mrb[0].mxu0
        %v1566 = vadd.f32 0.0, %v1565
        %v1567 = vpop.f32.mrb[0].mxu0
        %v1568 = vadd.f32 0.0, %v1567
        %1569 = vmatprep.mubr.f32.mxu0 %v236
        %1570 = vmatmul.mubr.f32.gmra.mrb[0].mxu0 %v235
        %v1571 = vpop.f32.mrb[0].mxu0
        %v1572 = vadd.f32 0.0, %v1571
        %v1573 = vpop.f32.mrb[0].mxu0
        %v1574 = vadd.f32 0.0, %v1573
        %1575 = vmatprep.mubr.f32.mxu0 %v244
        %1576 = vmatmul.mubr.f32.gmra.mrb[0].mxu0 %v243
        %v1577 = vpop.f32.mrb[0].mxu0
        %v1578 = vadd.f32 0.0, %v1577
        %v1579 = vpop.f32.mrb[0].mxu0
        %v1580 = vadd.f32 0.0, %v1579
        %1581 = vmatprep.mubr.f32.mxu0 %v252
        %1582 = vmatmul.mubr.f32.gmra.mrb[0].mxu0 %v251
        %v1583 = vpop.f32.mrb[0].mxu0
        %v1584 = vadd.f32 0.0, %v1583
        %v1585 = vpop.f32.mrb[0].mxu0
        %v1586 = vadd.f32 0.0, %v1585
        %1587 = vmatprep.mubr.f32.mxu0 %v260
        %1588 = vmatmul.mubr.f32.gmra.mrb[0].mxu0 %v259
        %v1589 = vpop.f32.mrb[0].mxu0
        %v1590 = vadd.f32 0.0, %v1589
        %v1591 = vpop.f32.mrb[0].mxu0
        %v1592 = vadd.f32 0.0, %v1591
        %1593 = vmatprep.mubr.f32.mxu0 %v268
        %1594 = vmatmul.mubr.f32.gmra.mrb[0].mxu0 %v267
        %v1595 = vpop.f32.mrb[0].mxu0
        %v1596 = vadd.f32 0.0, %v1595
        %v1597 = vpop.f32.mrb[0].mxu0
        %v1598 = vadd.f32 0.0, %v1597
        %1599 = vmatprep.mubr.f32.mxu0 %v276
        %1600 = vmatmul.mubr.f32.gmra.mrb[0].mxu0 %v275
        %v1601 = vpop.f32.mrb[0].mxu0
        %v1602 = vadd.f32 0.0, %v1601
        %v1603 = vpop.f32.mrb[0].mxu0
        %v1604 = vadd.f32 0.0, %v1603
        %1605 = vmatprep.mubr.f32.mxu0 %v284
        %1606 = vmatmul.mubr.f32.gmra.mrb[0].mxu0 %v283
        %v1607 = vpop.f32.mrb[0].mxu0
        %v1608 = vadd.f32 0.0, %v1607
        %v1609 = vpop.f32.mrb[0].mxu0
        %v1610 = vadd.f32 0.0, %v1609
        %1611 = vmatprep.mubr.f32.mxu0 %v292
        %1612 = vmatmul.mubr.f32.gmra.mrb[0].mxu0 %v291
        %v1613 = vpop.f32.mrb[0].mxu0
        %v1614 = vadd.f32 0.0, %v1613
        %v1615 = vpop.f32.mrb[0].mxu0
        %v1616 = vadd.f32 0.0, %v1615
        %1617 = vmatprep.mubr.f32.mxu0 %v300
        %1618 = vmatmul.mubr.f32.gmra.mrb[0].mxu0 %v299
        %v1619 = vpop.f32.mrb[0].mxu0
        %v1620 = vadd.f32 0.0, %v1619
        %v1621 = vpop.f32.mrb[0].mxu0
        %v1622 = vadd.f32 0.0, %v1621
        %1623 = vdwg.mxu0
        %1624 = vmatprep.subr.mxu0 %v438
        %1625 = vmatpush1.msra.mxu0 %v437
        %1626 = vmatprep.subr.mxu0 %v442
        %1627 = vmatpush1.msra.mxu0 %v441
        %1628 = vmatprep.subr.mxu0 %v446
        %1629 = vmatpush1.msra.mxu0 %v445
        %1630 = vmatprep.subr.mxu0 %v450
        %1631 = vmatpush1.msra.mxu0 %v449
        %1632 = vmatprep.subr.mxu0 %v454
        %1633 = vmatpush1.msra.mxu0 %v453
        %1634 = vmatprep.subr.mxu0 %v458
        %1635 = vmatpush1.msra.mxu0 %v457
        %1636 = vmatprep.subr.mxu0 %v462
        %1637 = vmatpush1.msra.mxu0 %v461
        %1638 = vmatprep.subr.mxu0 %v466
        %1639 = vmatpush1.msra.mxu0 %v465
        %1640 = vmatprep.subr.mxu0 %v470
        %1641 = vmatpush1.msra.mxu0 %v469
        %1642 = vmatprep.subr.mxu0 %v474
        %1643 = vmatpush1.msra.mxu0 %v473
        %1644 = vmatprep.subr.mxu0 %v478
        %1645 = vmatpush1.msra.mxu0 %v477
        %1646 = vmatprep.subr.mxu0 %v482
        %1647 = vmatpush1.msra.mxu0 %v481
        %1648 = vmatprep.subr.mxu0 %v486
        %1649 = vmatpush1.msra.mxu0 %v485
        %1650 = vmatprep.subr.mxu0 %v490
        %1651 = vmatpush1.msra.mxu0 %v489
        %1652 = vmatprep.subr.mxu0 %v494
        %1653 = vmatpush1.msra.mxu0 %v493
        %1654 = vmatprep.subr.mxu0 %v498
        %1655 = vmatpush1.msra.mxu0 %v497
        %1656 = vmatprep.subr.mxu0 %v502
        %1657 = vmatpush1.msra.mxu0 %v501
        %1658 = vmatprep.subr.mxu0 %v506
        %1659 = vmatpush1.msra.mxu0 %v505
        %1660 = vmatprep.subr.mxu0 %v510
        %1661 = vmatpush1.msra.mxu0 %v509
        %1662 = vmatprep.subr.mxu0 %v514
        %1663 = vmatpush1.msra.mxu0 %v513
        %1664 = vmatprep.subr.mxu0 %v518
        %1665 = vmatpush1.msra.mxu0 %v517
        %1666 = vmatprep.subr.mxu0 %v522
        %1667 = vmatpush1.msra.mxu0 %v521
        %1668 = vmatprep.subr.mxu0 %v526
        %1669 = vmatpush1.msra.mxu0 %v525
        %1670 = vmatprep.subr.mxu0 %v530
        %1671 = vmatpush1.msra.mxu0 %v529
        %1672 = vmatprep.subr.mxu0 %v534
        %1673 = vmatpush1.msra.mxu0 %v533
        %1674 = vmatprep.subr.mxu0 %v538
        %1675 = vmatpush1.msra.mxu0 %v537
        %1676 = vmatprep.subr.mxu0 %v542
        %1677 = vmatpush1.msra.mxu0 %v541
        %1678 = vmatprep.subr.mxu0 %v546
        %1679 = vmatpush1.msra.mxu0 %v545
        %1680 = vmatprep.subr.mxu0 %v550
        %1681 = vmatpush1.msra.mxu0 %v549
        %1682 = vmatprep.subr.mxu0 %v554
        %1683 = vmatpush1.msra.mxu0 %v553
        %1684 = vmatprep.subr.mxu0 %v558
        %1685 = vmatpush1.msra.mxu0 %v557
        %1686 = vmatprep.subr.mxu0 %v562
        %1687 = vmatpush1.msra.mxu0 %v561
        %1688 = vmatprep.mubr.f32.mxu0 %v182
        %1689 = vmatmul.mubr.f32.gmra.mrb[0].mxu0 %v181
        %v1690 = vpop.f32.mrb[0].mxu0
        %v1691 = vadd.f32 %v1530, %v1690
        %v1692 = vpop.f32.mrb[0].mxu0
        %v1693 = vadd.f32 %v1532, %v1692
        %1694 = vmatprep.mubr.f32.mxu0 %v190
        %1695 = vmatmul.mubr.f32.gmra.mrb[0].mxu0 %v189
        %v1696 = vpop.f32.mrb[0].mxu0
        %v1697 = vadd.f32 %v1536, %v1696
        %v1698 = vpop.f32.mrb[0].mxu0
        %v1699 = vadd.f32 %v1538, %v1698
        %1700 = vmatprep.mubr.f32.mxu0 %v198
        %1701 = vmatmul.mubr.f32.gmra.mrb[0].mxu0 %v197
        %v1702 = vpop.f32.mrb[0].mxu0
        %v1703 = vadd.f32 %v1542, %v1702
        %v1704 = vpop.f32.mrb[0].mxu0
        %v1705 = vadd.f32 %v1544, %v1704
        %1706 = vmatprep.mubr.f32.mxu0 %v206
        %1707 = vmatmul.mubr.f32.gmra.mrb[0].mxu0 %v205
        %v1708 = vpop.f32.mrb[0].mxu0
        %v1709 = vadd.f32 %v1548, %v1708
        %v1710 = vpop.f32.mrb[0].mxu0
        %v1711 = vadd.f32 %v1550, %v1710
        %1712 = vmatprep.mubr.f32.mxu0 %v214
        %1713 = vmatmul.mubr.f32.gmra.mrb[0].mxu0 %v213
        %v1714 = vpop.f32.mrb[0].mxu0
        %v1715 = vadd.f32 %v1554, %v1714
        %v1716 = vpop.f32.mrb[0].mxu0
        %v1717 = vadd.f32 %v1556, %v1716
        %1718 = vmatprep.mubr.f32.mxu0 %v222
        %1719 = vmatmul.mubr.f32.gmra.mrb[0].mxu0 %v221
        %v1720 = vpop.f32.mrb[0].mxu0
        %v1721 = vadd.f32 %v1560, %v1720
        %v1722 = vpop.f32.mrb[0].mxu0
        %v1723 = vadd.f32 %v1562, %v1722
        %1724 = vmatprep.mubr.f32.mxu0 %v230
        %1725 = vmatmul.mubr.f32.gmra.mrb[0].mxu0 %v229
        %v1726 = vpop.f32.mrb[0].mxu0
        %v1727 = vadd.f32 %v1566, %v1726
        %v1728 = vpop.f32.mrb[0].mxu0
        %v1729 = vadd.f32 %v1568, %v1728
        %1730 = vmatprep.mubr.f32.mxu0 %v238
        %1731 = vmatmul.mubr.f32.gmra.mrb[0].mxu0 %v237
        %v1732 = vpop.f32.mrb[0].mxu0
        %v1733 = vadd.f32 %v1572, %v1732
        %v1734 = vpop.f32.mrb[0].mxu0
        %v1735 = vadd.f32 %v1574, %v1734
        %1736 = vmatprep.mubr.f32.mxu0 %v246
        %1737 = vmatmul.mubr.f32.gmra.mrb[0].mxu0 %v245
        %v1738 = vpop.f32.mrb[0].mxu0
        %v1739 = vadd.f32 %v1578, %v1738
        %v1740 = vpop.f32.mrb[0].mxu0
        %v1741 = vadd.f32 %v1580, %v1740
        %1742 = vmatprep.mubr.f32.mxu0 %v254
        %1743 = vmatmul.mubr.f32.gmra.mrb[0].mxu0 %v253
        %v1744 = vpop.f32.mrb[0].mxu0
        %v1745 = vadd.f32 %v1584, %v1744
        %v1746 = vpop.f32.mrb[0].mxu0
        %v1747 = vadd.f32 %v1586, %v1746
        %1748 = vmatprep.mubr.f32.mxu0 %v262
        %1749 = vmatmul.mubr.f32.gmra.mrb[0].mxu0 %v261
        %v1750 = vpop.f32.mrb[0].mxu0
        %v1751 = vadd.f32 %v1590, %v1750
        %v1752 = vpop.f32.mrb[0].mxu0
        %v1753 = vadd.f32 %v1592, %v1752
        %1754 = vmatprep.mubr.f32.mxu0 %v270
        %1755 = vmatmul.mubr.f32.gmra.mrb[0].mxu0 %v269
        %v1756 = vpop.f32.mrb[0].mxu0
        %v1757 = vadd.f32 %v1596, %v1756
        %v1758 = vpop.f32.mrb[0].mxu0
        %v1759 = vadd.f32 %v1598, %v1758
        %1760 = vmatprep.mubr.f32.mxu0 %v278
        %1761 = vmatmul.mubr.f32.gmra.mrb[0].mxu0 %v277
        %v1762 = vpop.f32.mrb[0].mxu0
        %v1763 = vadd.f32 %v1602, %v1762
        %v1764 = vpop.f32.mrb[0].mxu0
        %v1765 = vadd.f32 %v1604, %v1764
        %1766 = vmatprep.mubr.f32.mxu0 %v286
        %1767 = vmatmul.mubr.f32.gmra.mrb[0].mxu0 %v285
        %v1768 = vpop.f32.mrb[0].mxu0
        %v1769 = vadd.f32 %v1608, %v1768
        %v1770 = vpop.f32.mrb[0].mxu0
        %v1771 = vadd.f32 %v1610, %v1770
        %1772 = vmatprep.mubr.f32.mxu0 %v294
        %1773 = vmatmul.mubr.f32.gmra.mrb[0].mxu0 %v293
        %v1774 = vpop.f32.mrb[0].mxu0
        %v1775 = vadd.f32 %v1614, %v1774
        %v1776 = vpop.f32.mrb[0].mxu0
        %v1777 = vadd.f32 %v1616, %v1776
        %1778 = vmatprep.mubr.f32.mxu0 %v302
        %1779 = vmatmul.mubr.f32.gmra.mrb[0].mxu0 %v301
        %v1780 = vpop.f32.mrb[0].mxu0
        %v1781 = vadd.f32 %v1620, %v1780
        %v1782 = vpop.f32.mrb[0].mxu0
        %v1783 = vadd.f32 %v1622, %v1782
        %1784 = vdwg.mxu0
        %1785 = vmatprep.subr.mxu0 %v566
        %1786 = vmatpush1.msra.mxu0 %v565
        %1787 = vmatprep.subr.mxu0 %v570
        %1788 = vmatpush1.msra.mxu0 %v569
        %1789 = vmatprep.subr.mxu0 %v574
        %1790 = vmatpush1.msra.mxu0 %v573
        %1791 = vmatprep.subr.mxu0 %v578
        %1792 = vmatpush1.msra.mxu0 %v577
        %1793 = vmatprep.subr.mxu0 %v582
        %1794 = vmatpush1.msra.mxu0 %v581
        %1795 = vmatprep.subr.mxu0 %v586
        %1796 = vmatpush1.msra.mxu0 %v585
        %1797 = vmatprep.subr.mxu0 %v590
        %1798 = vmatpush1.msra.mxu0 %v589
        %1799 = vmatprep.subr.mxu0 %v594
        %1800 = vmatpush1.msra.mxu0 %v593
        %1801 = vmatprep.subr.mxu0 %v598
        %1802 = vmatpush1.msra.mxu0 %v597
        %1803 = vmatprep.subr.mxu0 %v602
        %1804 = vmatpush1.msra.mxu0 %v601
        %1805 = vmatprep.subr.mxu0 %v606
        %1806 = vmatpush1.msra.mxu0 %v605
        %1807 = vmatprep.subr.mxu0 %v610
        %1808 = vmatpush1.msra.mxu0 %v609
        %1809 = vmatprep.subr.mxu0 %v614
        %1810 = vmatpush1.msra.mxu0 %v613
        %1811 = vmatprep.subr.mxu0 %v618
        %1812 = vmatpush1.msra.mxu0 %v617
        %1813 = vmatprep.subr.mxu0 %v622
        %1814 = vmatpush1.msra.mxu0 %v621
        %1815 = vmatprep.subr.mxu0 %v626
        %1816 = vmatpush1.msra.mxu0 %v625
        %1817 = vmatprep.subr.mxu0 %v630
        %1818 = vmatpush1.msra.mxu0 %v629
        %1819 = vmatprep.subr.mxu0 %v634
        %1820 = vmatpush1.msra.mxu0 %v633
        %1821 = vmatprep.subr.mxu0 %v638
        %1822 = vmatpush1.msra.mxu0 %v637
        %1823 = vmatprep.subr.mxu0 %v642
        %1824 = vmatpush1.msra.mxu0 %v641
        %1825 = vmatprep.subr.mxu0 %v646
        %1826 = vmatpush1.msra.mxu0 %v645
        %1827 = vmatprep.subr.mxu0 %v650
        %1828 = vmatpush1.msra.mxu0 %v649
        %1829 = vmatprep.subr.mxu0 %v654
        %1830 = vmatpush1.msra.mxu0 %v653
        %1831 = vmatprep.subr.mxu0 %v658
        %1832 = vmatpush1.msra.mxu0 %v657
        %1833 = vmatprep.subr.mxu0 %v662
        %1834 = vmatpush1.msra.mxu0 %v661
        %1835 = vmatprep.subr.mxu0 %v666
        %1836 = vmatpush1.msra.mxu0 %v665
        %1837 = vmatprep.subr.mxu0 %v670
        %1838 = vmatpush1.msra.mxu0 %v669
        %1839 = vmatprep.subr.mxu0 %v674
        %1840 = vmatpush1.msra.mxu0 %v673
        %1841 = vmatprep.subr.mxu0 %v678
        %1842 = vmatpush1.msra.mxu0 %v677
        %1843 = vmatprep.subr.mxu0 %v682
        %1844 = vmatpush1.msra.mxu0 %v681
        %1845 = vmatprep.subr.mxu0 %v686
        %1846 = vmatpush1.msra.mxu0 %v685
        %1847 = vmatprep.subr.mxu0 %v690
        %1848 = vmatpush1.msra.mxu0 %v689
        %1849 = vmatprep.mubr.f32.mxu0 %v184
        %1850 = vmatmul.mubr.f32.gmra.mrb[0].mxu0 %v183
        %v1851 = vpop.f32.mrb[0].mxu0
        %v1852 = vadd.f32 %v1691, %v1851
        %v1853 = vpop.f32.mrb[0].mxu0
        %v1854 = vadd.f32 %v1693, %v1853
        %1855 = vmatprep.mubr.f32.mxu0 %v192
        %1856 = vmatmul.mubr.f32.gmra.mrb[0].mxu0 %v191
        %v1857 = vpop.f32.mrb[0].mxu0
        %v1858 = vadd.f32 %v1697, %v1857
        %v1859 = vpop.f32.mrb[0].mxu0
        %v1860 = vadd.f32 %v1699, %v1859
        %1861 = vmatprep.mubr.f32.mxu0 %v200
        %1862 = vmatmul.mubr.f32.gmra.mrb[0].mxu0 %v199
        %v1863 = vpop.f32.mrb[0].mxu0
        %v1864 = vadd.f32 %v1703, %v1863
        %v1865 = vpop.f32.mrb[0].mxu0
        %v1866 = vadd.f32 %v1705, %v1865
        %1867 = vmatprep.mubr.f32.mxu0 %v208
        %1868 = vmatmul.mubr.f32.gmra.mrb[0].mxu0 %v207
        %v1869 = vpop.f32.mrb[0].mxu0
        %v1870 = vadd.f32 %v1709, %v1869
        %v1871 = vpop.f32.mrb[0].mxu0
        %v1872 = vadd.f32 %v1711, %v1871
        %1873 = vmatprep.mubr.f32.mxu0 %v216
        %1874 = vmatmul.mubr.f32.gmra.mrb[0].mxu0 %v215
        %v1875 = vpop.f32.mrb[0].mxu0
        %v1876 = vadd.f32 %v1715, %v1875
        %v1877 = vpop.f32.mrb[0].mxu0
        %v1878 = vadd.f32 %v1717, %v1877
        %1879 = vmatprep.mubr.f32.mxu0 %v224
        %1880 = vmatmul.mubr.f32.gmra.mrb[0].mxu0 %v223
        %v1881 = vpop.f32.mrb[0].mxu0
        %v1882 = vadd.f32 %v1721, %v1881
        %v1883 = vpop.f32.mrb[0].mxu0
        %v1884 = vadd.f32 %v1723, %v1883
        %1885 = vmatprep.mubr.f32.mxu0 %v232
        %1886 = vmatmul.mubr.f32.gmra.mrb[0].mxu0 %v231
        %v1887 = vpop.f32.mrb[0].mxu0
        %v1888 = vadd.f32 %v1727, %v1887
        %v1889 = vpop.f32.mrb[0].mxu0
        %v1890 = vadd.f32 %v1729, %v1889
        %1891 = vmatprep.mubr.f32.mxu0 %v240
        %1892 = vmatmul.mubr.f32.gmra.mrb[0].mxu0 %v239
        %v1893 = vpop.f32.mrb[0].mxu0
        %v1894 = vadd.f32 %v1733, %v1893
        %v1895 = vpop.f32.mrb[0].mxu0
        %v1896 = vadd.f32 %v1735, %v1895
        %1897 = vmatprep.mubr.f32.mxu0 %v248
        %1898 = vmatmul.mubr.f32.gmra.mrb[0].mxu0 %v247
        %v1899 = vpop.f32.mrb[0].mxu0
        %v1900 = vadd.f32 %v1739, %v1899
        %v1901 = vpop.f32.mrb[0].mxu0
        %v1902 = vadd.f32 %v1741, %v1901
        %1903 = vmatprep.mubr.f32.mxu0 %v256
        %1904 = vmatmul.mubr.f32.gmra.mrb[0].mxu0 %v255
        %v1905 = vpop.f32.mrb[0].mxu0
        %v1906 = vadd.f32 %v1745, %v1905
        %v1907 = vpop.f32.mrb[0].mxu0
        %v1908 = vadd.f32 %v1747, %v1907
        %1909 = vmatprep.mubr.f32.mxu0 %v264
        %1910 = vmatmul.mubr.f32.gmra.mrb[0].mxu0 %v263
        %v1911 = vpop.f32.mrb[0].mxu0
        %v1912 = vadd.f32 %v1751, %v1911
        %v1913 = vpop.f32.mrb[0].mxu0
        %v1914 = vadd.f32 %v1753, %v1913
        %1915 = vmatprep.mubr.f32.mxu0 %v272
        %1916 = vmatmul.mubr.f32.gmra.mrb[0].mxu0 %v271
        %v1917 = vpop.f32.mrb[0].mxu0
        %v1918 = vadd.f32 %v1757, %v1917
        %v1919 = vpop.f32.mrb[0].mxu0
        %v1920 = vadd.f32 %v1759, %v1919
        %1921 = vmatprep.mubr.f32.mxu0 %v280
        %1922 = vmatmul.mubr.f32.gmra.mrb[0].mxu0 %v279
        %v1923 = vpop.f32.mrb[0].mxu0
        %v1924 = vadd.f32 %v1763, %v1923
        %v1925 = vpop.f32.mrb[0].mxu0
        %v1926 = vadd.f32 %v1765, %v1925
        %1927 = vmatprep.mubr.f32.mxu0 %v288
        %1928 = vmatmul.mubr.f32.gmra.mrb[0].mxu0 %v287
        %v1929 = vpop.f32.mrb[0].mxu0
        %v1930 = vadd.f32 %v1769, %v1929
        %v1931 = vpop.f32.mrb[0].mxu0
        %v1932 = vadd.f32 %v1771, %v1931
        %1933 = vmatprep.mubr.f32.mxu0 %v296
        %1934 = vmatmul.mubr.f32.gmra.mrb[0].mxu0 %v295
        %v1935 = vpop.f32.mrb[0].mxu0
        %v1936 = vadd.f32 %v1775, %v1935
        %v1937 = vpop.f32.mrb[0].mxu0
        %v1938 = vadd.f32 %v1777, %v1937
        %1939 = vmatprep.mubr.f32.mxu0 %v304
        %1940 = vmatmul.mubr.f32.gmra.mrb[0].mxu0 %v303
        %v1941 = vpop.f32.mrb[0].mxu0
        %v1942 = vadd.f32 %v1781, %v1941
        %v1943 = vpop.f32.mrb[0].mxu0
        %v1944 = vadd.f32 %v1783, %v1943
        %1945 = vdwg.mxu0
        %1946 = vmatprep.subr.mxu0 %v694
        %1947 = vmatpush1.msra.mxu0 %v693
        %1948 = vmatprep.subr.mxu0 %v698
        %1949 = vmatpush1.msra.mxu0 %v697
        %1950 = vmatprep.subr.mxu0 %v702
        %1951 = vmatpush1.msra.mxu0 %v701
        %1952 = vmatprep.subr.mxu0 %v706
        %1953 = vmatpush1.msra.mxu0 %v705
        %1954 = vmatprep.subr.mxu0 %v710
        %1955 = vmatpush1.msra.mxu0 %v709
        %1956 = vmatprep.subr.mxu0 %v714
        %1957 = vmatpush1.msra.mxu0 %v713
        %1958 = vmatprep.subr.mxu0 %v718
        %1959 = vmatpush1.msra.mxu0 %v717
        %1960 = vmatprep.subr.mxu0 %v722
        %1961 = vmatpush1.msra.mxu0 %v721
        %1962 = vmatprep.subr.mxu0 %v726
        %1963 = vmatpush1.msra.mxu0 %v725
        %1964 = vmatprep.subr.mxu0 %v730
        %1965 = vmatpush1.msra.mxu0 %v729
        %1966 = vmatprep.subr.mxu0 %v734
        %1967 = vmatpush1.msra.mxu0 %v733
        %1968 = vmatprep.subr.mxu0 %v738
        %1969 = vmatpush1.msra.mxu0 %v737
        %1970 = vmatprep.subr.mxu0 %v742
        %1971 = vmatpush1.msra.mxu0 %v741
        %1972 = vmatprep.subr.mxu0 %v746
        %1973 = vmatpush1.msra.mxu0 %v745
        %1974 = vmatprep.subr.mxu0 %v750
        %1975 = vmatpush1.msra.mxu0 %v749
        %1976 = vmatprep.subr.mxu0 %v754
        %1977 = vmatpush1.msra.mxu0 %v753
        %1978 = vmatprep.subr.mxu0 %v758
        %1979 = vmatpush1.msra.mxu0 %v757
        %1980 = vmatprep.subr.mxu0 %v762
        %1981 = vmatpush1.msra.mxu0 %v761
        %1982 = vmatprep.subr.mxu0 %v766
        %1983 = vmatpush1.msra.mxu0 %v765
        %1984 = vmatprep.subr.mxu0 %v770
        %1985 = vmatpush1.msra.mxu0 %v769
        %1986 = vmatprep.subr.mxu0 %v774
        %1987 = vmatpush1.msra.mxu0 %v773
        %1988 = vmatprep.subr.mxu0 %v778
        %1989 = vmatpush1.msra.mxu0 %v777
        %1990 = vmatprep.subr.mxu0 %v782
        %1991 = vmatpush1.msra.mxu0 %v781
        %1992 = vmatprep.subr.mxu0 %v786
        %1993 = vmatpush1.msra.mxu0 %v785
        %1994 = vmatprep.subr.mxu0 %v790
        %1995 = vmatpush1.msra.mxu0 %v789
        %1996 = vmatprep.subr.mxu0 %v794
        %1997 = vmatpush1.msra.mxu0 %v793
        %1998 = vmatprep.subr.mxu0 %v798
        %1999 = vmatpush1.msra.mxu0 %v797
        %2000 = vmatprep.subr.mxu0 %v802
        %2001 = vmatpush1.msra.mxu0 %v801
        %2002 = vmatprep.subr.mxu0 %v806
        %2003 = vmatpush1.msra.mxu0 %v805
        %2004 = vmatprep.subr.mxu0 %v810
        %2005 = vmatpush1.msra.mxu0 %v809
        %2006 = vmatprep.subr.mxu0 %v814
        %2007 = vmatpush1.msra.mxu0 %v813
        %2008 = vmatprep.subr.mxu0 %v818
        %2009 = vmatpush1.msra.mxu0 %v817
        %2010 = vmatprep.mubr.f32.mxu0 %v186
        %2011 = vmatmul.mubr.f32.gmra.mrb[0].mxu0 %v185
        %v2012 = vpop.f32.mrb[0].mxu0
        %v2013 = vadd.f32 %v1852, %v2012
        %v2014 = vpop.f32.mrb[0].mxu0
        %v2015 = vadd.f32 %v1854, %v2014
        %2016 = vmatprep.mubr.f32.mxu0 %v194
        %2017 = vmatmul.mubr.f32.gmra.mrb[0].mxu0 %v193
        %v2018 = vpop.f32.mrb[0].mxu0
        %v2019 = vadd.f32 %v1858, %v2018
        %v2020 = vpop.f32.mrb[0].mxu0
        %v2021 = vadd.f32 %v1860, %v2020
        %2022 = vmatprep.mubr.f32.mxu0 %v202
        %2023 = vmatmul.mubr.f32.gmra.mrb[0].mxu0 %v201
        %v2024 = vpop.f32.mrb[0].mxu0
        %v2025 = vadd.f32 %v1864, %v2024
        %v2026 = vpop.f32.mrb[0].mxu0
        %v2027 = vadd.f32 %v1866, %v2026
        %2028 = vmatprep.mubr.f32.mxu0 %v210
        %2029 = vmatmul.mubr.f32.gmra.mrb[0].mxu0 %v209
        %v2030 = vpop.f32.mrb[0].mxu0
        %v2031 = vadd.f32 %v1870, %v2030
        %v2032 = vpop.f32.mrb[0].mxu0
        %v2033 = vadd.f32 %v1872, %v2032
        %2034 = vmatprep.mubr.f32.mxu0 %v218
        %2035 = vmatmul.mubr.f32.gmra.mrb[0].mxu0 %v217
        %v2036 = vpop.f32.mrb[0].mxu0
        %v2037 = vadd.f32 %v1876, %v2036
        %v2038 = vpop.f32.mrb[0].mxu0
        %v2039 = vadd.f32 %v1878, %v2038
        %2040 = vmatprep.mubr.f32.mxu0 %v226
        %2041 = vmatmul.mubr.f32.gmra.mrb[0].mxu0 %v225
        %v2042 = vpop.f32.mrb[0].mxu0
        %v2043 = vadd.f32 %v1882, %v2042
        %v2044 = vpop.f32.mrb[0].mxu0
        %v2045 = vadd.f32 %v1884, %v2044
        %2046 = vmatprep.mubr.f32.mxu0 %v234
        %2047 = vmatmul.mubr.f32.gmra.mrb[0].mxu0 %v233
        %v2048 = vpop.f32.mrb[0].mxu0
        %v2049 = vadd.f32 %v1888, %v2048
        %v2050 = vpop.f32.mrb[0].mxu0
        %v2051 = vadd.f32 %v1890, %v2050
        %2052 = vmatprep.mubr.f32.mxu0 %v242
        %2053 = vmatmul.mubr.f32.gmra.mrb[0].mxu0 %v241
        %v2054 = vpop.f32.mrb[0].mxu0
        %v2055 = vadd.f32 %v1894, %v2054
        %v2056 = vpop.f32.mrb[0].mxu0
        %v2057 = vadd.f32 %v1896, %v2056
        %2058 = vmatprep.mubr.f32.mxu0 %v250
        %2059 = vmatmul.mubr.f32.gmra.mrb[0].mxu0 %v249
        %v2060 = vpop.f32.mrb[0].mxu0
        %v2061 = vadd.f32 %v1900, %v2060
        %v2062 = vpop.f32.mrb[0].mxu0
        %v2063 = vadd.f32 %v1902, %v2062
        %2064 = vmatprep.mubr.f32.mxu0 %v258
        %2065 = vmatmul.mubr.f32.gmra.mrb[0].mxu0 %v257
        %v2066 = vpop.f32.mrb[0].mxu0
        %v2067 = vadd.f32 %v1906, %v2066
        %v2068 = vpop.f32.mrb[0].mxu0
        %v2069 = vadd.f32 %v1908, %v2068
        %2070 = vmatprep.mubr.f32.mxu0 %v266
        %2071 = vmatmul.mubr.f32.gmra.mrb[0].mxu0 %v265
        %v2072 = vpop.f32.mrb[0].mxu0
        %v2073 = vadd.f32 %v1912, %v2072
        %v2074 = vpop.f32.mrb[0].mxu0
        %v2075 = vadd.f32 %v1914, %v2074
        %2076 = vmatprep.mubr.f32.mxu0 %v274
        %2077 = vmatmul.mubr.f32.gmra.mrb[0].mxu0 %v273
        %v2078 = vpop.f32.mrb[0].mxu0
        %v2079 = vadd.f32 %v1918, %v2078
        %v2080 = vpop.f32.mrb[0].mxu0
        %v2081 = vadd.f32 %v1920, %v2080
        %2082 = vmatprep.mubr.f32.mxu0 %v282
        %2083 = vmatmul.mubr.f32.gmra.mrb[0].mxu0 %v281
        %v2084 = vpop.f32.mrb[0].mxu0
        %v2085 = vadd.f32 %v1924, %v2084
        %v2086 = vpop.f32.mrb[0].mxu0
        %v2087 = vadd.f32 %v1926, %v2086
        %2088 = vmatprep.mubr.f32.mxu0 %v290
        %2089 = vmatmul.mubr.f32.gmra.mrb[0].mxu0 %v289
        %v2090 = vpop.f32.mrb[0].mxu0
        %v2091 = vadd.f32 %v1930, %v2090
        %v2092 = vpop.f32.mrb[0].mxu0
        %v2093 = vadd.f32 %v1932, %v2092
        %2094 = vmatprep.mubr.f32.mxu0 %v298
        %2095 = vmatmul.mubr.f32.gmra.mrb[0].mxu0 %v297
        %v2096 = vpop.f32.mrb[0].mxu0
        %v2097 = vadd.f32 %v1936, %v2096
        %v2098 = vpop.f32.mrb[0].mxu0
        %v2099 = vadd.f32 %v1938, %v2098
        %2100 = vmatprep.mubr.f32.mxu0 %v306
        %2101 = vmatmul.mubr.f32.gmra.mrb[0].mxu0 %v305
        %v2102 = vpop.f32.mrb[0].mxu0
        %v2103 = vadd.f32 %v1942, %v2102
        %v2104 = vpop.f32.mrb[0].mxu0
        %v2105 = vadd.f32 %v1944, %v2104
        %2106 = vdwg.mxu0
        %v2107 = vmax.f32 %v1369, 0.0
        %v2108 = vmax.f32 %v1371, 0.0
        %v2109 = vmax.f32 %v2013, 0.0
        %v2110 = vmax.f32 %v2015, 0.0
        %v2111 = vmax.f32 %v1375, 0.0
        %v2112 = vmax.f32 %v1377, 0.0
        %v2113 = vmax.f32 %v2019, 0.0
        %v2114 = vmax.f32 %v2021, 0.0
        %v2115 = vmax.f32 %v1381, 0.0
        %v2116 = vmax.f32 %v1383, 0.0
        %v2117 = vmax.f32 %v2025, 0.0
        %v2118 = vmax.f32 %v2027, 0.0
        %v2119 = vmax.f32 %v1387, 0.0
        %v2120 = vmax.f32 %v1389, 0.0
        %v2121 = vmax.f32 %v2031, 0.0
        %v2122 = vmax.f32 %v2033, 0.0
        %v2123 = vmax.f32 %v1393, 0.0
        %v2124 = vmax.f32 %v1395, 0.0
        %v2125 = vmax.f32 %v2037, 0.0
        %v2126 = vmax.f32 %v2039, 0.0
        %v2127 = vmax.f32 %v1399, 0.0
        %v2128 = vmax.f32 %v1401, 0.0
        %v2129 = vmax.f32 %v2043, 0.0
        %v2130 = vmax.f32 %v2045, 0.0
        %v2131 = vmax.f32 %v1405, 0.0
        %v2132 = vmax.f32 %v1407, 0.0
        %v2133 = vmax.f32 %v2049, 0.0
        %v2134 = vmax.f32 %v2051, 0.0
        %v2135 = vmax.f32 %v1411, 0.0
        %v2136 = vmax.f32 %v1413, 0.0
        %v2137 = vmax.f32 %v2055, 0.0
        %v2138 = vmax.f32 %v2057, 0.0
        %v2139 = vmax.f32 %v1417, 0.0
        %v2140 = vmax.f32 %v1419, 0.0
        %v2141 = vmax.f32 %v2061, 0.0
        %v2142 = vmax.f32 %v2063, 0.0
        %v2143 = vmax.f32 %v1423, 0.0
        %v2144 = vmax.f32 %v1425, 0.0
        %v2145 = vmax.f32 %v2067, 0.0
        %v2146 = vmax.f32 %v2069, 0.0
        %v2147 = vmax.f32 %v1429, 0.0
        %v2148 = vmax.f32 %v1431, 0.0
        %v2149 = vmax.f32 %v2073, 0.0
        %v2150 = vmax.f32 %v2075, 0.0
        %v2151 = vmax.f32 %v1435, 0.0
        %v2152 = vmax.f32 %v1437, 0.0
        %v2153 = vmax.f32 %v2079, 0.0
        %v2154 = vmax.f32 %v2081, 0.0
        %v2155 = vmax.f32 %v1441, 0.0
        %v2156 = vmax.f32 %v1443, 0.0
        %v2157 = vmax.f32 %v2085, 0.0
        %v2158 = vmax.f32 %v2087, 0.0
        %v2159 = vmax.f32 %v1447, 0.0
        %v2160 = vmax.f32 %v1449, 0.0
        %v2161 = vmax.f32 %v2091, 0.0
        %v2162 = vmax.f32 %v2093, 0.0
        %v2163 = vmax.f32 %v1453, 0.0
        %v2164 = vmax.f32 %v1455, 0.0
        %v2165 = vmax.f32 %v2097, 0.0
        %v2166 = vmax.f32 %v2099, 0.0
        %v2167 = vmax.f32 %v1459, 0.0
        %v2168 = vmax.f32 %v1461, 0.0
        %v2169 = vmax.f32 %v2103, 0.0
        %v2170 = vmax.f32 %v2105, 0.0
        %v2171 = vrsqrt.pop %v2107
        %v2172 = vmul.f32 %v2107, %v2171
        %vm2173 = vcmp.eq.f32.partialorder %v2107, inf
        %v2174 = vsel %vm2173, %v2107, %v2172
        %vm2175 = vcmp.eq.f32.partialorder %v2107, 0.0
        %v2176 = vand.u32 %v2107, 2147483648
        %v2177 = vsel %vm2175, %v2176, %v2174
        %v2178 = vrsqrt.pop %v2108
        %v2179 = vmul.f32 %v2108, %v2178
        %vm2180 = vcmp.eq.f32.partialorder %v2108, inf
        %v2181 = vsel %vm2180, %v2108, %v2179
        %vm2182 = vcmp.eq.f32.partialorder %v2108, 0.0
        %v2183 = vand.u32 %v2108, 2147483648
        %v2184 = vsel %vm2182, %v2183, %v2181
        %v2185 = vrsqrt.pop %v2109
        %v2186 = vmul.f32 %v2109, %v2185
        %vm2187 = vcmp.eq.f32.partialorder %v2109, inf
        %v2188 = vsel %vm2187, %v2109, %v2186
        %vm2189 = vcmp.eq.f32.partialorder %v2109, 0.0
        %v2190 = vand.u32 %v2109, 2147483648
        %v2191 = vsel %vm2189, %v2190, %v2188
        %v2192 = vrsqrt.pop %v2110
        %v2193 = vmul.f32 %v2110, %v2192
        %vm2194 = vcmp.eq.f32.partialorder %v2110, inf
        %v2195 = vsel %vm2194, %v2110, %v2193
        %vm2196 = vcmp.eq.f32.partialorder %v2110, 0.0
        %v2197 = vand.u32 %v2110, 2147483648
        %v2198 = vsel %vm2196, %v2197, %v2195
        %v2199 = vrsqrt.pop %v2111
        %v2200 = vmul.f32 %v2111, %v2199
        %vm2201 = vcmp.eq.f32.partialorder %v2111, inf
        %v2202 = vsel %vm2201, %v2111, %v2200
        %vm2203 = vcmp.eq.f32.partialorder %v2111, 0.0
        %v2204 = vand.u32 %v2111, 2147483648
        %v2205 = vsel %vm2203, %v2204, %v2202
        %v2206 = vrsqrt.pop %v2112
        %v2207 = vmul.f32 %v2112, %v2206
        %vm2208 = vcmp.eq.f32.partialorder %v2112, inf
        %v2209 = vsel %vm2208, %v2112, %v2207
        %vm2210 = vcmp.eq.f32.partialorder %v2112, 0.0
        %v2211 = vand.u32 %v2112, 2147483648
        %v2212 = vsel %vm2210, %v2211, %v2209
        %v2213 = vrsqrt.pop %v2113
        %v2214 = vmul.f32 %v2113, %v2213
        %vm2215 = vcmp.eq.f32.partialorder %v2113, inf
        %v2216 = vsel %vm2215, %v2113, %v2214
        %vm2217 = vcmp.eq.f32.partialorder %v2113, 0.0
        %v2218 = vand.u32 %v2113, 2147483648
        %v2219 = vsel %vm2217, %v2218, %v2216
        %v2220 = vrsqrt.pop %v2114
        %v2221 = vmul.f32 %v2114, %v2220
        %vm2222 = vcmp.eq.f32.partialorder %v2114, inf
        %v2223 = vsel %vm2222, %v2114, %v2221
        %vm2224 = vcmp.eq.f32.partialorder %v2114, 0.0
        %v2225 = vand.u32 %v2114, 2147483648
        %v2226 = vsel %vm2224, %v2225, %v2223
        %v2227 = vrsqrt.pop %v2115
        %v2228 = vmul.f32 %v2115, %v2227
        %vm2229 = vcmp.eq.f32.partialorder %v2115, inf
        %v2230 = vsel %vm2229, %v2115, %v2228
        %vm2231 = vcmp.eq.f32.partialorder %v2115, 0.0
        %v2232 = vand.u32 %v2115, 2147483648
        %v2233 = vsel %vm2231, %v2232, %v2230
        %v2234 = vrsqrt.pop %v2116
        %v2235 = vmul.f32 %v2116, %v2234
        %vm2236 = vcmp.eq.f32.partialorder %v2116, inf
        %v2237 = vsel %vm2236, %v2116, %v2235
        %vm2238 = vcmp.eq.f32.partialorder %v2116, 0.0
        %v2239 = vand.u32 %v2116, 2147483648
        %v2240 = vsel %vm2238, %v2239, %v2237
        %v2241 = vrsqrt.pop %v2117
        %v2242 = vmul.f32 %v2117, %v2241
        %vm2243 = vcmp.eq.f32.partialorder %v2117, inf
        %v2244 = vsel %vm2243, %v2117, %v2242
        %vm2245 = vcmp.eq.f32.partialorder %v2117, 0.0
        %v2246 = vand.u32 %v2117, 2147483648
        %v2247 = vsel %vm2245, %v2246, %v2244
        %v2248 = vrsqrt.pop %v2118
        %v2249 = vmul.f32 %v2118, %v2248
        %vm2250 = vcmp.eq.f32.partialorder %v2118, inf
        %v2251 = vsel %vm2250, %v2118, %v2249
        %vm2252 = vcmp.eq.f32.partialorder %v2118, 0.0
        %v2253 = vand.u32 %v2118, 2147483648
        %v2254 = vsel %vm2252, %v2253, %v2251
        %v2255 = vrsqrt.pop %v2119
        %v2256 = vmul.f32 %v2119, %v2255
        %vm2257 = vcmp.eq.f32.partialorder %v2119, inf
        %v2258 = vsel %vm2257, %v2119, %v2256
        %vm2259 = vcmp.eq.f32.partialorder %v2119, 0.0
        %v2260 = vand.u32 %v2119, 2147483648
        %v2261 = vsel %vm2259, %v2260, %v2258
        %v2262 = vrsqrt.pop %v2120
        %v2263 = vmul.f32 %v2120, %v2262
        %vm2264 = vcmp.eq.f32.partialorder %v2120, inf
        %v2265 = vsel %vm2264, %v2120, %v2263
        %vm2266 = vcmp.eq.f32.partialorder %v2120, 0.0
        %v2267 = vand.u32 %v2120, 2147483648
        %v2268 = vsel %vm2266, %v2267, %v2265
        %v2269 = vrsqrt.pop %v2121
        %v2270 = vmul.f32 %v2121, %v2269
        %vm2271 = vcmp.eq.f32.partialorder %v2121, inf
        %v2272 = vsel %vm2271, %v2121, %v2270
        %vm2273 = vcmp.eq.f32.partialorder %v2121, 0.0
        %v2274 = vand.u32 %v2121, 2147483648
        %v2275 = vsel %vm2273, %v2274, %v2272
        %v2276 = vrsqrt.pop %v2122
        %v2277 = vmul.f32 %v2122, %v2276
        %vm2278 = vcmp.eq.f32.partialorder %v2122, inf
        %v2279 = vsel %vm2278, %v2122, %v2277
        %vm2280 = vcmp.eq.f32.partialorder %v2122, 0.0
        %v2281 = vand.u32 %v2122, 2147483648
        %v2282 = vsel %vm2280, %v2281, %v2279
        %v2283 = vrsqrt.pop %v2123
        %v2284 = vmul.f32 %v2123, %v2283
        %vm2285 = vcmp.eq.f32.partialorder %v2123, inf
        %v2286 = vsel %vm2285, %v2123, %v2284
        %vm2287 = vcmp.eq.f32.partialorder %v2123, 0.0
        %v2288 = vand.u32 %v2123, 2147483648
        %v2289 = vsel %vm2287, %v2288, %v2286
        %v2290 = vrsqrt.pop %v2124
        %v2291 = vmul.f32 %v2124, %v2290
        %vm2292 = vcmp.eq.f32.partialorder %v2124, inf
        %v2293 = vsel %vm2292, %v2124, %v2291
        %vm2294 = vcmp.eq.f32.partialorder %v2124, 0.0
        %v2295 = vand.u32 %v2124, 2147483648
        %v2296 = vsel %vm2294, %v2295, %v2293
        %v2297 = vrsqrt.pop %v2125
        %v2298 = vmul.f32 %v2125, %v2297
        %vm2299 = vcmp.eq.f32.partialorder %v2125, inf
        %v2300 = vsel %vm2299, %v2125, %v2298
        %vm2301 = vcmp.eq.f32.partialorder %v2125, 0.0
        %v2302 = vand.u32 %v2125, 2147483648
        %v2303 = vsel %vm2301, %v2302, %v2300
        %v2304 = vrsqrt.pop %v2126
        %v2305 = vmul.f32 %v2126, %v2304
        %vm2306 = vcmp.eq.f32.partialorder %v2126, inf
        %v2307 = vsel %vm2306, %v2126, %v2305
        %vm2308 = vcmp.eq.f32.partialorder %v2126, 0.0
        %v2309 = vand.u32 %v2126, 2147483648
        %v2310 = vsel %vm2308, %v2309, %v2307
        %v2311 = vrsqrt.pop %v2127
        %v2312 = vmul.f32 %v2127, %v2311
        %vm2313 = vcmp.eq.f32.partialorder %v2127, inf
        %v2314 = vsel %vm2313, %v2127, %v2312
        %vm2315 = vcmp.eq.f32.partialorder %v2127, 0.0
        %v2316 = vand.u32 %v2127, 2147483648
        %v2317 = vsel %vm2315, %v2316, %v2314
        %v2318 = vrsqrt.pop %v2128
        %v2319 = vmul.f32 %v2128, %v2318
        %vm2320 = vcmp.eq.f32.partialorder %v2128, inf
        %v2321 = vsel %vm2320, %v2128, %v2319
        %vm2322 = vcmp.eq.f32.partialorder %v2128, 0.0
        %v2323 = vand.u32 %v2128, 2147483648
        %v2324 = vsel %vm2322, %v2323, %v2321
        %v2325 = vrsqrt.pop %v2129
        %v2326 = vmul.f32 %v2129, %v2325
        %vm2327 = vcmp.eq.f32.partialorder %v2129, inf
        %v2328 = vsel %vm2327, %v2129, %v2326
        %vm2329 = vcmp.eq.f32.partialorder %v2129, 0.0
        %v2330 = vand.u32 %v2129, 2147483648
        %v2331 = vsel %vm2329, %v2330, %v2328
        %v2332 = vrsqrt.pop %v2130
        %v2333 = vmul.f32 %v2130, %v2332
        %vm2334 = vcmp.eq.f32.partialorder %v2130, inf
        %v2335 = vsel %vm2334, %v2130, %v2333
        %vm2336 = vcmp.eq.f32.partialorder %v2130, 0.0
        %v2337 = vand.u32 %v2130, 2147483648
        %v2338 = vsel %vm2336, %v2337, %v2335
        %v2339 = vrsqrt.pop %v2131
        %v2340 = vmul.f32 %v2131, %v2339
        %vm2341 = vcmp.eq.f32.partialorder %v2131, inf
        %v2342 = vsel %vm2341, %v2131, %v2340
        %vm2343 = vcmp.eq.f32.partialorder %v2131, 0.0
        %v2344 = vand.u32 %v2131, 2147483648
        %v2345 = vsel %vm2343, %v2344, %v2342
        %v2346 = vrsqrt.pop %v2132
        %v2347 = vmul.f32 %v2132, %v2346
        %vm2348 = vcmp.eq.f32.partialorder %v2132, inf
        %v2349 = vsel %vm2348, %v2132, %v2347
        %vm2350 = vcmp.eq.f32.partialorder %v2132, 0.0
        %v2351 = vand.u32 %v2132, 2147483648
        %v2352 = vsel %vm2350, %v2351, %v2349
        %v2353 = vrsqrt.pop %v2133
        %v2354 = vmul.f32 %v2133, %v2353
        %vm2355 = vcmp.eq.f32.partialorder %v2133, inf
        %v2356 = vsel %vm2355, %v2133, %v2354
        %vm2357 = vcmp.eq.f32.partialorder %v2133, 0.0
        %v2358 = vand.u32 %v2133, 2147483648
        %v2359 = vsel %vm2357, %v2358, %v2356
        %v2360 = vrsqrt.pop %v2134
        %v2361 = vmul.f32 %v2134, %v2360
        %vm2362 = vcmp.eq.f32.partialorder %v2134, inf
        %v2363 = vsel %vm2362, %v2134, %v2361
        %vm2364 = vcmp.eq.f32.partialorder %v2134, 0.0
        %v2365 = vand.u32 %v2134, 2147483648
        %v2366 = vsel %vm2364, %v2365, %v2363
        %v2367 = vrsqrt.pop %v2135
        %v2368 = vmul.f32 %v2135, %v2367
        %vm2369 = vcmp.eq.f32.partialorder %v2135, inf
        %v2370 = vsel %vm2369, %v2135, %v2368
        %vm2371 = vcmp.eq.f32.partialorder %v2135, 0.0
        %v2372 = vand.u32 %v2135, 2147483648
        %v2373 = vsel %vm2371, %v2372, %v2370
        %v2374 = vrsqrt.pop %v2136
        %v2375 = vmul.f32 %v2136, %v2374
        %vm2376 = vcmp.eq.f32.partialorder %v2136, inf
        %v2377 = vsel %vm2376, %v2136, %v2375
        %vm2378 = vcmp.eq.f32.partialorder %v2136, 0.0
        %v2379 = vand.u32 %v2136, 2147483648
        %v2380 = vsel %vm2378, %v2379, %v2377
        %v2381 = vrsqrt.pop %v2137
        %v2382 = vmul.f32 %v2137, %v2381
        %vm2383 = vcmp.eq.f32.partialorder %v2137, inf
        %v2384 = vsel %vm2383, %v2137, %v2382
        %vm2385 = vcmp.eq.f32.partialorder %v2137, 0.0
        %v2386 = vand.u32 %v2137, 2147483648
        %v2387 = vsel %vm2385, %v2386, %v2384
        %v2388 = vrsqrt.pop %v2138
        %v2389 = vmul.f32 %v2138, %v2388
        %vm2390 = vcmp.eq.f32.partialorder %v2138, inf
        %v2391 = vsel %vm2390, %v2138, %v2389
        %vm2392 = vcmp.eq.f32.partialorder %v2138, 0.0
        %v2393 = vand.u32 %v2138, 2147483648
        %v2394 = vsel %vm2392, %v2393, %v2391
        %v2395 = vrsqrt.pop %v2139
        %v2396 = vmul.f32 %v2139, %v2395
        %vm2397 = vcmp.eq.f32.partialorder %v2139, inf
        %v2398 = vsel %vm2397, %v2139, %v2396
        %vm2399 = vcmp.eq.f32.partialorder %v2139, 0.0
        %v2400 = vand.u32 %v2139, 2147483648
        %v2401 = vsel %vm2399, %v2400, %v2398
        %v2402 = vrsqrt.pop %v2140
        %v2403 = vmul.f32 %v2140, %v2402
        %vm2404 = vcmp.eq.f32.partialorder %v2140, inf
        %v2405 = vsel %vm2404, %v2140, %v2403
        %vm2406 = vcmp.eq.f32.partialorder %v2140, 0.0
        %v2407 = vand.u32 %v2140, 2147483648
        %v2408 = vsel %vm2406, %v2407, %v2405
        %v2409 = vrsqrt.pop %v2141
        %v2410 = vmul.f32 %v2141, %v2409
        %vm2411 = vcmp.eq.f32.partialorder %v2141, inf
        %v2412 = vsel %vm2411, %v2141, %v2410
        %vm2413 = vcmp.eq.f32.partialorder %v2141, 0.0
        %v2414 = vand.u32 %v2141, 2147483648
        %v2415 = vsel %vm2413, %v2414, %v2412
        %v2416 = vrsqrt.pop %v2142
        %v2417 = vmul.f32 %v2142, %v2416
        %vm2418 = vcmp.eq.f32.partialorder %v2142, inf
        %v2419 = vsel %vm2418, %v2142, %v2417
        %vm2420 = vcmp.eq.f32.partialorder %v2142, 0.0
        %v2421 = vand.u32 %v2142, 2147483648
        %v2422 = vsel %vm2420, %v2421, %v2419
        %v2423 = vrsqrt.pop %v2143
        %v2424 = vmul.f32 %v2143, %v2423
        %vm2425 = vcmp.eq.f32.partialorder %v2143, inf
        %v2426 = vsel %vm2425, %v2143, %v2424
        %vm2427 = vcmp.eq.f32.partialorder %v2143, 0.0
        %v2428 = vand.u32 %v2143, 2147483648
        %v2429 = vsel %vm2427, %v2428, %v2426
        %v2430 = vrsqrt.pop %v2144
        %v2431 = vmul.f32 %v2144, %v2430
        %vm2432 = vcmp.eq.f32.partialorder %v2144, inf
        %v2433 = vsel %vm2432, %v2144, %v2431
        %vm2434 = vcmp.eq.f32.partialorder %v2144, 0.0
        %v2435 = vand.u32 %v2144, 2147483648
        %v2436 = vsel %vm2434, %v2435, %v2433
        %v2437 = vrsqrt.pop %v2145
        %v2438 = vmul.f32 %v2145, %v2437
        %vm2439 = vcmp.eq.f32.partialorder %v2145, inf
        %v2440 = vsel %vm2439, %v2145, %v2438
        %vm2441 = vcmp.eq.f32.partialorder %v2145, 0.0
        %v2442 = vand.u32 %v2145, 2147483648
        %v2443 = vsel %vm2441, %v2442, %v2440
        %v2444 = vrsqrt.pop %v2146
        %v2445 = vmul.f32 %v2146, %v2444
        %vm2446 = vcmp.eq.f32.partialorder %v2146, inf
        %v2447 = vsel %vm2446, %v2146, %v2445
        %vm2448 = vcmp.eq.f32.partialorder %v2146, 0.0
        %v2449 = vand.u32 %v2146, 2147483648
        %v2450 = vsel %vm2448, %v2449, %v2447
        %v2451 = vrsqrt.pop %v2147
        %v2452 = vmul.f32 %v2147, %v2451
        %vm2453 = vcmp.eq.f32.partialorder %v2147, inf
        %v2454 = vsel %vm2453, %v2147, %v2452
        %vm2455 = vcmp.eq.f32.partialorder %v2147, 0.0
        %v2456 = vand.u32 %v2147, 2147483648
        %v2457 = vsel %vm2455, %v2456, %v2454
        %v2458 = vrsqrt.pop %v2148
        %v2459 = vmul.f32 %v2148, %v2458
        %vm2460 = vcmp.eq.f32.partialorder %v2148, inf
        %v2461 = vsel %vm2460, %v2148, %v2459
        %vm2462 = vcmp.eq.f32.partialorder %v2148, 0.0
        %v2463 = vand.u32 %v2148, 2147483648
        %v2464 = vsel %vm2462, %v2463, %v2461
        %v2465 = vrsqrt.pop %v2149
        %v2466 = vmul.f32 %v2149, %v2465
        %vm2467 = vcmp.eq.f32.partialorder %v2149, inf
        %v2468 = vsel %vm2467, %v2149, %v2466
        %vm2469 = vcmp.eq.f32.partialorder %v2149, 0.0
        %v2470 = vand.u32 %v2149, 2147483648
        %v2471 = vsel %vm2469, %v2470, %v2468
        %v2472 = vrsqrt.pop %v2150
        %v2473 = vmul.f32 %v2150, %v2472
        %vm2474 = vcmp.eq.f32.partialorder %v2150, inf
        %v2475 = vsel %vm2474, %v2150, %v2473
        %vm2476 = vcmp.eq.f32.partialorder %v2150, 0.0
        %v2477 = vand.u32 %v2150, 2147483648
        %v2478 = vsel %vm2476, %v2477, %v2475
        %v2479 = vrsqrt.pop %v2151
        %v2480 = vmul.f32 %v2151, %v2479
        %vm2481 = vcmp.eq.f32.partialorder %v2151, inf
        %v2482 = vsel %vm2481, %v2151, %v2480
        %vm2483 = vcmp.eq.f32.partialorder %v2151, 0.0
        %v2484 = vand.u32 %v2151, 2147483648
        %v2485 = vsel %vm2483, %v2484, %v2482
        %v2486 = vrsqrt.pop %v2152
        %v2487 = vmul.f32 %v2152, %v2486
        %vm2488 = vcmp.eq.f32.partialorder %v2152, inf
        %v2489 = vsel %vm2488, %v2152, %v2487
        %vm2490 = vcmp.eq.f32.partialorder %v2152, 0.0
        %v2491 = vand.u32 %v2152, 2147483648
        %v2492 = vsel %vm2490, %v2491, %v2489
        %v2493 = vrsqrt.pop %v2153
        %v2494 = vmul.f32 %v2153, %v2493
        %vm2495 = vcmp.eq.f32.partialorder %v2153, inf
        %v2496 = vsel %vm2495, %v2153, %v2494
        %vm2497 = vcmp.eq.f32.partialorder %v2153, 0.0
        %v2498 = vand.u32 %v2153, 2147483648
        %v2499 = vsel %vm2497, %v2498, %v2496
        %v2500 = vrsqrt.pop %v2154
        %v2501 = vmul.f32 %v2154, %v2500
        %vm2502 = vcmp.eq.f32.partialorder %v2154, inf
        %v2503 = vsel %vm2502, %v2154, %v2501
        %vm2504 = vcmp.eq.f32.partialorder %v2154, 0.0
        %v2505 = vand.u32 %v2154, 2147483648
        %v2506 = vsel %vm2504, %v2505, %v2503
        %v2507 = vrsqrt.pop %v2155
        %v2508 = vmul.f32 %v2155, %v2507
        %vm2509 = vcmp.eq.f32.partialorder %v2155, inf
        %v2510 = vsel %vm2509, %v2155, %v2508
        %vm2511 = vcmp.eq.f32.partialorder %v2155, 0.0
        %v2512 = vand.u32 %v2155, 2147483648
        %v2513 = vsel %vm2511, %v2512, %v2510
        %v2514 = vrsqrt.pop %v2156
        %v2515 = vmul.f32 %v2156, %v2514
        %vm2516 = vcmp.eq.f32.partialorder %v2156, inf
        %v2517 = vsel %vm2516, %v2156, %v2515
        %vm2518 = vcmp.eq.f32.partialorder %v2156, 0.0
        %v2519 = vand.u32 %v2156, 2147483648
        %v2520 = vsel %vm2518, %v2519, %v2517
        %v2521 = vrsqrt.pop %v2157
        %v2522 = vmul.f32 %v2157, %v2521
        %vm2523 = vcmp.eq.f32.partialorder %v2157, inf
        %v2524 = vsel %vm2523, %v2157, %v2522
        %vm2525 = vcmp.eq.f32.partialorder %v2157, 0.0
        %v2526 = vand.u32 %v2157, 2147483648
        %v2527 = vsel %vm2525, %v2526, %v2524
        %v2528 = vrsqrt.pop %v2158
        %v2529 = vmul.f32 %v2158, %v2528
        %vm2530 = vcmp.eq.f32.partialorder %v2158, inf
        %v2531 = vsel %vm2530, %v2158, %v2529
        %vm2532 = vcmp.eq.f32.partialorder %v2158, 0.0
        %v2533 = vand.u32 %v2158, 2147483648
        %v2534 = vsel %vm2532, %v2533, %v2531
        %v2535 = vrsqrt.pop %v2159
        %v2536 = vmul.f32 %v2159, %v2535
        %vm2537 = vcmp.eq.f32.partialorder %v2159, inf
        %v2538 = vsel %vm2537, %v2159, %v2536
        %vm2539 = vcmp.eq.f32.partialorder %v2159, 0.0
        %v2540 = vand.u32 %v2159, 2147483648
        %v2541 = vsel %vm2539, %v2540, %v2538
        %v2542 = vrsqrt.pop %v2160
        %v2543 = vmul.f32 %v2160, %v2542
        %vm2544 = vcmp.eq.f32.partialorder %v2160, inf
        %v2545 = vsel %vm2544, %v2160, %v2543
        %vm2546 = vcmp.eq.f32.partialorder %v2160, 0.0
        %v2547 = vand.u32 %v2160, 2147483648
        %v2548 = vsel %vm2546, %v2547, %v2545
        %v2549 = vrsqrt.pop %v2161
        %v2550 = vmul.f32 %v2161, %v2549
        %vm2551 = vcmp.eq.f32.partialorder %v2161, inf
        %v2552 = vsel %vm2551, %v2161, %v2550
        %vm2553 = vcmp.eq.f32.partialorder %v2161, 0.0
        %v2554 = vand.u32 %v2161, 2147483648
        %v2555 = vsel %vm2553, %v2554, %v2552
        %v2556 = vrsqrt.pop %v2162
        %v2557 = vmul.f32 %v2162, %v2556
        %vm2558 = vcmp.eq.f32.partialorder %v2162, inf
        %v2559 = vsel %vm2558, %v2162, %v2557
        %vm2560 = vcmp.eq.f32.partialorder %v2162, 0.0
        %v2561 = vand.u32 %v2162, 2147483648
        %v2562 = vsel %vm2560, %v2561, %v2559
        %v2563 = vrsqrt.pop %v2163
        %v2564 = vmul.f32 %v2163, %v2563
        %vm2565 = vcmp.eq.f32.partialorder %v2163, inf
        %v2566 = vsel %vm2565, %v2163, %v2564
        %vm2567 = vcmp.eq.f32.partialorder %v2163, 0.0
        %v2568 = vand.u32 %v2163, 2147483648
        %v2569 = vsel %vm2567, %v2568, %v2566
        %v2570 = vrsqrt.pop %v2164
        %v2571 = vmul.f32 %v2164, %v2570
        %vm2572 = vcmp.eq.f32.partialorder %v2164, inf
        %v2573 = vsel %vm2572, %v2164, %v2571
        %vm2574 = vcmp.eq.f32.partialorder %v2164, 0.0
        %v2575 = vand.u32 %v2164, 2147483648
        %v2576 = vsel %vm2574, %v2575, %v2573
        %v2577 = vrsqrt.pop %v2165
        %v2578 = vmul.f32 %v2165, %v2577
        %vm2579 = vcmp.eq.f32.partialorder %v2165, inf
        %v2580 = vsel %vm2579, %v2165, %v2578
        %vm2581 = vcmp.eq.f32.partialorder %v2165, 0.0
        %v2582 = vand.u32 %v2165, 2147483648
        %v2583 = vsel %vm2581, %v2582, %v2580
        %v2584 = vrsqrt.pop %v2166
        %v2585 = vmul.f32 %v2166, %v2584
        %vm2586 = vcmp.eq.f32.partialorder %v2166, inf
        %v2587 = vsel %vm2586, %v2166, %v2585
        %vm2588 = vcmp.eq.f32.partialorder %v2166, 0.0
        %v2589 = vand.u32 %v2166, 2147483648
        %v2590 = vsel %vm2588, %v2589, %v2587
        %v2591 = vrsqrt.pop %v2167
        %v2592 = vmul.f32 %v2167, %v2591
        %vm2593 = vcmp.eq.f32.partialorder %v2167, inf
        %v2594 = vsel %vm2593, %v2167, %v2592
        %vm2595 = vcmp.eq.f32.partialorder %v2167, 0.0
        %v2596 = vand.u32 %v2167, 2147483648
        %v2597 = vsel %vm2595, %v2596, %v2594
        %v2598 = vrsqrt.pop %v2168
        %v2599 = vmul.f32 %v2168, %v2598
        %vm2600 = vcmp.eq.f32.partialorder %v2168, inf
        %v2601 = vsel %vm2600, %v2168, %v2599
        %vm2602 = vcmp.eq.f32.partialorder %v2168, 0.0
        %v2603 = vand.u32 %v2168, 2147483648
        %v2604 = vsel %vm2602, %v2603, %v2601
        %v2605 = vrsqrt.pop %v2169
        %v2606 = vmul.f32 %v2169, %v2605
        %vm2607 = vcmp.eq.f32.partialorder %v2169, inf
        %v2608 = vsel %vm2607, %v2169, %v2606
        %vm2609 = vcmp.eq.f32.partialorder %v2169, 0.0
        %v2610 = vand.u32 %v2169, 2147483648
        %v2611 = vsel %vm2609, %v2610, %v2608
        %v2612 = vrsqrt.pop %v2170
        %v2613 = vmul.f32 %v2170, %v2612
        %vm2614 = vcmp.eq.f32.partialorder %v2170, inf
        %v2615 = vsel %vm2614, %v2170, %v2613
        %vm2616 = vcmp.eq.f32.partialorder %v2170, 0.0
        %v2617 = vand.u32 %v2170, 2147483648
        %v2618 = vsel %vm2616, %v2617, %v2615
        %2619 = vst [vmem:[%s176] sm:$0xff] %v2177
        %2620 = vst [vmem:[%s176 + $0x8] sm:$0xff] %v2184
        %2621 = vst [vmem:[%s176 + $0x10] sm:$0xff] %v2191
        %2622 = vst [vmem:[%s176 + $0x18] sm:$0xff] %v2198
        %2623 = vst [vmem:[%s176 + $0x20] sm:$0xff] %v2205
        %2624 = vst [vmem:[%s176 + $0x28] sm:$0xff] %v2212
        %2625 = vst [vmem:[%s176 + $0x30] sm:$0xff] %v2219
        %2626 = vst [vmem:[%s176 + $0x38] sm:$0xff] %v2226
        %2627 = vst [vmem:[%s176 + $0x40] sm:$0xff] %v2233
        %2628 = vst [vmem:[%s176 + $0x48] sm:$0xff] %v2240
        %2629 = vst [vmem:[%s176 + $0x50] sm:$0xff] %v2247
        %2630 = vst [vmem:[%s176 + $0x58] sm:$0xff] %v2254
        %2631 = vst [vmem:[%s176 + $0x60] sm:$0xff] %v2261
        %2632 = vst [vmem:[%s176 + $0x68] sm:$0xff] %v2268
        %2633 = vst [vmem:[%s176 + $0x70] sm:$0xff] %v2275
        %2634 = vst [vmem:[%s176 + $0x78] sm:$0xff] %v2282
        %2635 = vst [vmem:[%s176 + $0x80] sm:$0xff] %v2289
        %2636 = vst [vmem:[%s176 + $0x88] sm:$0xff] %v2296
        %2637 = vst [vmem:[%s176 + $0x90] sm:$0xff] %v2303
        %2638 = vst [vmem:[%s176 + $0x98] sm:$0xff] %v2310
        %2639 = vst [vmem:[%s176 + $0xa0] sm:$0xff] %v2317
        %2640 = vst [vmem:[%s176 + $0xa8] sm:$0xff] %v2324
        %2641 = vst [vmem:[%s176 + $0xb0] sm:$0xff] %v2331
        %2642 = vst [vmem:[%s176 + $0xb8] sm:$0xff] %v2338
        %2643 = vst [vmem:[%s176 + $0xc0] sm:$0xff] %v2345
        %2644 = vst [vmem:[%s176 + $0xc8] sm:$0xff] %v2352
        %2645 = vst [vmem:[%s176 + $0xd0] sm:$0xff] %v2359
        %2646 = vst [vmem:[%s176 + $0xd8] sm:$0xff] %v2366
        %2647 = vst [vmem:[%s176 + $0xe0] sm:$0xff] %v2373
        %2648 = vst [vmem:[%s176 + $0xe8] sm:$0xff] %v2380
        %2649 = vst [vmem:[%s176 + $0xf0] sm:$0xff] %v2387
        %2650 = vst [vmem:[%s176 + $0xf8] sm:$0xff] %v2394
        %2651 = vst [vmem:[%s176 + $0x100] sm:$0xff] %v2401
        %2652 = vst [vmem:[%s176 + $0x108] sm:$0xff] %v2408
        %2653 = vst [vmem:[%s176 + $0x110] sm:$0xff] %v2415
        %2654 = vst [vmem:[%s176 + $0x118] sm:$0xff] %v2422
        %2655 = vst [vmem:[%s176 + $0x120] sm:$0xff] %v2429
        %2656 = vst [vmem:[%s176 + $0x128] sm:$0xff] %v2436
        %2657 = vst [vmem:[%s176 + $0x130] sm:$0xff] %v2443
        %2658 = vst [vmem:[%s176 + $0x138] sm:$0xff] %v2450
        %2659 = vst [vmem:[%s176 + $0x140] sm:$0xff] %v2457
        %2660 = vst [vmem:[%s176 + $0x148] sm:$0xff] %v2464
        %2661 = vst [vmem:[%s176 + $0x150] sm:$0xff] %v2471
        %2662 = vst [vmem:[%s176 + $0x158] sm:$0xff] %v2478
        %2663 = vst [vmem:[%s176 + $0x160] sm:$0xff] %v2485
        %2664 = vst [vmem:[%s176 + $0x168] sm:$0xff] %v2492
        %2665 = vst [vmem:[%s176 + $0x170] sm:$0xff] %v2499
        %2666 = vst [vmem:[%s176 + $0x178] sm:$0xff] %v2506
        %2667 = vst [vmem:[%s176 + $0x180] sm:$0xff] %v2513
        %2668 = vst [vmem:[%s176 + $0x188] sm:$0xff] %v2520
        %2669 = vst [vmem:[%s176 + $0x190] sm:$0xff] %v2527
        %2670 = vst [vmem:[%s176 + $0x198] sm:$0xff] %v2534
        %2671 = vst [vmem:[%s176 + $0x1a0] sm:$0xff] %v2541
        %2672 = vst [vmem:[%s176 + $0x1a8] sm:$0xff] %v2548
        %2673 = vst [vmem:[%s176 + $0x1b0] sm:$0xff] %v2555
        %2674 = vst [vmem:[%s176 + $0x1b8] sm:$0xff] %v2562
        %2675 = vst [vmem:[%s176 + $0x1c0] sm:$0xff] %v2569
        %2676 = vst [vmem:[%s176 + $0x1c8] sm:$0xff] %v2576
        %2677 = vst [vmem:[%s176 + $0x1d0] sm:$0xff] %v2583
        %2678 = vst [vmem:[%s176 + $0x1d8] sm:$0xff] %v2590
        %2679 = vst [vmem:[%s176 + $0x1e0] sm:$0xff] %v2597
        %2680 = vst [vmem:[%s176 + $0x1e8] sm:$0xff] %v2604
        %2681 = vst [vmem:[%s176 + $0x1f0] sm:$0xff] %v2611
        %2682 = vst [vmem:[%s176 + $0x1f8] sm:$0xff] %v2618
        %s2683 = sand.u32 %s75, 1
        %s2684 = scalar_lea.sflag [#allocation4], %s2683
        %s2685 = sand.u32 %s75, 1
        %s2686 = smul.addr %s2685, 512
        %s2687 = scalar_lea.vmem [#allocation7], %s2686
        // Predicated region
        $region37: #{tpu_custom_call.1} parent=27 // pred_check
          %p2688 = pneg %p85
        $region38: #{tpu_custom_call.1} parent=27 // pred_check_branch
          %2690 = sbr.rel (%p2688) target = $region40
        $region39: #{tpu_custom_call.1} parent=27 // pred_region
          %s2691 = smul.u32 4, %s20
          %s2693 = ssub.s32 8192, 8192
          %2694 = vsyncadd %s2684, %s2693
          %s2695 = smul.addr %s2691, 128
          %s2696 = scalar_lea.hbm %s2, %s2695
          %s2697 = sshll.u32 %s2687, 4
          %s2698 = int_to_ptr.vmem [resolvable:$true] %s2697
          %2703 = dma.vmem_to_hbm [thread:$0]  %s2698, 8192, %s2696, %s2684, 512, 1024, 32
        $region40: #{tpu_custom_call.1} parent=27 // pred_fallthru
          _
      $region28: #{tpu_custom_call.1} parent=5 // pred_fallthru
        _
      %p2704 = scmp.le.s32.totalorder 2, %s15
      // Predicated region
      $region41: #{tpu_custom_call.1} parent=5 // pred_check
        %p2705 = pneg %p2704
      $region42: #{tpu_custom_call.1} parent=5 // pred_check_branch
        %2707 = sbr.rel (%p2705) target = $region44
      $region43: #{tpu_custom_call.1} parent=5 // pred_region
        %s2708 = ssub.s32 %s15, 2
        // Predicated region
        $region45: #{tpu_custom_call.1} parent=43 // pred_check
          %p2709 = pneg %p91
        $region46: #{tpu_custom_call.1} parent=43 // pred_check_branch
          %2711 = sbr.rel (%p2709) target = $region48
        $region47: #{tpu_custom_call.1} parent=43 // pred_region
          %s2712 = sand.u32 %s76, 1
          %s2713 = scalar_lea.sflag [#allocation4], %s2712
          %s2714 = sand.u32 %s76, 1
          %s2715 = smul.addr %s2714, 512
          %s2716 = scalar_lea.vmem [#allocation7], %s2715
          %2717 = dma.done %s2713, 8192
        $region48: #{tpu_custom_call.1} parent=43 // pred_fallthru
          _
      $region44: #{tpu_custom_call.1} parent=5 // pred_fallthru
        _
    $region6: #{tpu_custom_call.1} parent=1 // loop_footer
      %s19 = sadd.s32 1, %s15
    $region7: #{tpu_custom_call.1} parent=1 // loop_footer_branch
      %14 = sbr.rel target = $region3
    $region8: #{tpu_custom_call.1} parent=1 // loop_exit
      _
    %2718 = vsyncpa [#allocation3], 1
    %s2719 = scalar_lea.sflag [#allocation3], 1
    %2720 = vsyncpa %s2719, 1
    %2721 = vsyncpa [#allocation6], 1
    %s2722 = scalar_lea.sflag [#allocation6], 1
    %2723 = vsyncpa %s2722, 1
    %2724 = vsyncpa [#allocation4], 1
    %s2725 = scalar_lea.sflag [#allocation4], 1
    %2726 = vsyncpa %s2725, 1

</llo_original>
